<compile_context>
chip_gen: v7x
topology: tpu7x:2x2x1
jax: 0.10.0
libtpu: 0.0.40
codegen_flags: <defaults>
</compile_context>

<pallas_src>
import functools

import jax
import jax.numpy as jnp
from jax.experimental import pallas as pl
from jax.experimental.pallas import tpu as pltpu


def _round_up(v, m):
    return (v + m - 1) // m * m


def _gat_attention_kernel(s_src_ref, s_dst_ref, adjT_ref, hT_ref, w2T_ref,
                          b1_ref, b2_ref, out_ref, m_sc, l_sc, acc_sc,
                          *, negative_slope):
    """Online-softmax GAT attention + aggregation + fused conv2 (transposed layout).

    Grid = (destination tiles ["parallel"], source tiles ["arbitrary"]).

    Kernel-view shapes (destination axis is minor => every large tensor is lane-dense):
      s_src_ref : [H, K]      per-source attention score term (f32)
      s_dst_ref : [H, M]      per-destination attention score term (f32)
      adjT_ref  : [K, M]      int8 adjacency tile, adjT[src, dst] (self-loops included)
      hT_ref    : [H, C, K]   head-major projected source features (bf16)
      w2T_ref   : [O, H*C]    conv2 weight, transposed, O padded to 8 (bf16)
      b1_ref    : [H, C]      conv1 bias (f32)
      b2_ref    : [O, 1]      conv2 bias (f32)
      out_ref   : [O, M]      transposed output tile
      m_sc,l_sc : [H, 1, M]   online-softmax running max / denominator (f32 scratch)
      acc_sc    : [H, C, M]   running alpha-weighted aggregation (f32 scratch)
    """
    f32 = jnp.float32
    k_idx = pl.program_id(1)

    @pl.when(k_idx == 0)
    def _():
        m_sc[...] = jnp.full(m_sc.shape, -jnp.inf, f32)
        l_sc[...] = jnp.zeros(l_sc.shape, f32)
        acc_sc[...] = jnp.zeros(acc_sc.shape, f32)

    s_src = s_src_ref[...]                                       # [H, K]
    s_dst = s_dst_ref[...]                                       # [H, M]

    # logits[h, k, m] = LeakyReLU(s_src[h,k] + s_dst[h,m]) + mask_bias[k, m]
    logits = s_src[:, :, None] + s_dst[:, None, :]               # [H, K, M]
    logits = jnp.where(logits > 0, logits, negative_slope * logits)
    # Additive mask (one VPU add over H*K*M) instead of a boolean select.
    bias = (adjT_ref[...].astype(f32) - 1.0) * 1e30              # 0 on edges, -1e30 off
    logits = logits + bias[None, :, :]

    # Flash-style online softmax over the source axis (axis=1).
    m_prev = m_sc[...]                                           # [H, 1, M]
    m_new = jnp.maximum(m_prev, jnp.max(logits, axis=1, keepdims=True))
    corr = jnp.exp(m_prev - m_new)                               # [H, 1, M]
    p = jnp.exp(logits - m_new)                                  # [H, K, M]
    l_sc[...] = corr * l_sc[...] + jnp.sum(p, axis=1, keepdims=True)
    acc_sc[...] = corr * acc_sc[...] + jnp.einsum(
        'hck,hkm->hcm', hT_ref[...], p.astype(jnp.bfloat16),
        preferred_element_type=f32)                              # [H, C, M]
    m_sc[...] = m_new

    @pl.when(k_idx == pl.num_programs(1) - 1)
    def _():
        heads, c1, m_dst = acc_sc.shape
        inv_l = pl.reciprocal(l_sc[...], approx=True)            # [H, 1, M]
        h1 = acc_sc[...] * inv_l + b1_ref[...][:, :, None]       # [H, C, M]
        # ELU with a clamped exp argument (no inf in the unselected branch).
        h1 = jnp.where(h1 > 0, h1, jnp.exp(jnp.minimum(h1, 0.0)) - 1.0)
        h1_flat = h1.reshape(heads * c1, m_dst)                  # [128, M] lane-dense
        # conv2 with edge_index=None -> self-loop-only softmax == 1 -> plain linear.
        h2 = jnp.dot(w2T_ref[...], h1_flat.astype(jnp.bfloat16),
                     preferred_element_type=f32)                 # [O, M]
        h2 = h2 + b2_ref[...]
        h2 = jnp.where(h2 > 0, h2, jnp.exp(jnp.minimum(h2, 0.0)) - 1.0)
        out_ref[...] = h2.astype(out_ref.dtype)


def gnn_forward(x, edge_index, params):
    """Mirrors GNN.forward: elu(conv1(x, ei)) -> to_dense_batch -> elu(conv2(x, None)) -> mean(0)."""
    n, f_in = x.shape
    heads, c1 = params["a_src1"].shape            # 8, 16
    hc = heads * c1                                # 128
    out2 = params["W2"].shape[1]                   # 2
    o_pad = _round_up(out2, 8)

    # ---- tiling ---------------------------------------------------------------
    n8 = _round_up(n, 8)
    if n8 >= 256:
        tile_m = 128                               # lane-dense dst tile; >=2 tiles => megacore shard
        tile_k = min(512, _round_up(n8, 128))      # source (reduction) tile, multiple of 128
        n_pad = _round_up(n, tile_k)               # tile_m (128) divides n_pad as well
    else:
        # Small graph: single block per axis (block == padded dim keeps the lane layout
        # rule satisfied; megacore splitting is only worthwhile for larger graphs).
        tile_m = tile_k = n_pad = n8

    # ---- hoisted source-side work (computed ONCE, not per destination tile) ----
    src, dst = edge_index[0], edge_index[1]
    adjT = jnp.zeros((n_pad, n_pad), jnp.int8).at[src, dst].set(1)   # adjT[src, dst], de-duplicated
    diag = jnp.arange(n)
    adjT = adjT.at[diag, diag].set(1)                                # PyG add_self_loops (real nodes only)

    x_p = jnp.zeros((n_pad, f_in), jnp.float32).at[:n].set(x)
    h = x_p @ params["W1"]                                           # [n_pad, 128] single lane-dense matmul
    h_heads = h.reshape(n_pad, heads, c1)
    s_src = jnp.einsum('nhc,hc->hn', h_heads, params["a_src1"])       # [H, n_pad] per-source score term
    s_dst = jnp.einsum('nhc,hc->hn', h_heads, params["a_dst1"])       # [H, n_pad] per-destination score term
    hT = jnp.transpose(h_heads, (1, 2, 0)).astype(jnp.bfloat16)       # [H, C, n_pad] head-major, bf16 MXU input

    w2T = jnp.zeros((o_pad, hc), jnp.float32).at[:out2].set(params["W2"].T).astype(jnp.bfloat16)
    b1 = params["b1"].reshape(heads, c1).astype(jnp.float32)
    b2 = jnp.zeros((o_pad, 1), jnp.float32).at[:out2, 0].set(params["b2"].reshape(-1))

    grid = (n_pad // tile_m, n_pad // tile_k)      # (dst tiles, src tiles) -- reduction axis last
    out_t = pl.pallas_call(
        functools.partial(_gat_attention_kernel, negative_slope=0.2),
        out_shape=jax.ShapeDtypeStruct((o_pad, n_pad), jnp.float32),
        grid=grid,
        in_specs=[
            pl.BlockSpec((heads, tile_k), lambda i, k: (0, k)),        # s_src
            pl.BlockSpec((heads, tile_m), lambda i, k: (0, i)),        # s_dst
            pl.BlockSpec((tile_k, tile_m), lambda i, k: (k, i)),       # int8 adjacency stream
            pl.BlockSpec((heads, c1, tile_k), lambda i, k: (0, 0, k)), # head-major features (bf16)
            pl.BlockSpec((o_pad, hc), lambda i, k: (0, 0)),            # W2^T
            pl.BlockSpec((heads, c1), lambda i, k: (0, 0)),            # b1
            pl.BlockSpec((o_pad, 1), lambda i, k: (0, 0)),             # b2
        ],
        out_specs=pl.BlockSpec((o_pad, tile_m), lambda i, k: (0, i)),
        scratch_shapes=[
            pltpu.VMEM((heads, 1, tile_m), jnp.float32),   # running max
            pltpu.VMEM((heads, 1, tile_m), jnp.float32),   # running denominator
            pltpu.VMEM((heads, c1, tile_m), jnp.float32),  # running aggregation
        ],
        compiler_params=pltpu.CompilerParams(
            dimension_semantics=("parallel", "arbitrary"),
            vmem_limit_bytes=48 * 1024 * 1024,   # fits v7x's 64 MiB; tiles sized well below this
        ),
    )(s_src, s_dst, adjT, hT, w2T, b1, b2)

    # to_dense_batch -> [1, N, 128] and x.mean(dim=0) over the size-1 batch axis are both
    # identities here; un-transpose and drop node / output padding.
    # TODO(synk): to_dense_batch(x, edge_index) in the reference misuses the PyG API
    # (edge_index where a `batch` vector is expected); treated as batch=None.
    return out_t[:out2, :n].T


def _reference_forward(x, edge_index, params):
    """Pure-JAX reference with identical semantics (sanity check)."""
    n = x.shape[0]
    heads, out_ch = params["a_src1"].shape
    src, dst = edge_index[0], edge_index[1]
    adj = jnp.zeros((n, n), jnp.float32).at[dst, src].set(1.0)
    adj = jnp.maximum(adj, jnp.eye(n, dtype=jnp.float32))

    h = (x @ params["W1"]).reshape(n, heads, out_ch)                  # [N, H, C]
    e_src = jnp.einsum('nhc,hc->hn', h, params["a_src1"])             # [H, N]
    e_dst = jnp.einsum('nhc,hc->hn', h, params["a_dst1"])             # [H, N]
    logits = e_dst[:, :, None] + e_src[:, None, :]                    # [H, N(dst), N(src)]
    logits = jnp.where(logits > 0, logits, 0.2 * logits)
    logits = jnp.where(adj[None] > 0, logits, -1e30)
    alpha = jax.nn.softmax(logits, axis=-1)
    h1 = jnp.einsum('hij,jhc->ihc', alpha, h).reshape(n, heads * out_ch)
    h1 = jax.nn.elu(h1 + params["b1"])
    h2 = jax.nn.elu(h1 @ params["W2"] + params["b2"])
    return h2


if __name__ == "__main__":
    key = jax.random.PRNGKey(0)
    N = 16        # number of nodes
    F_IN = 8      # dataset.num_features (synthetic)
    E = 40        # number of edges

    ks = jax.random.split(key, 10)
    x = jax.random.normal(ks[0], (N, F_IN), jnp.float32)
    src = jax.random.randint(ks[1], (E,), 0, N)
    dst = jax.random.randint(ks[2], (E,), 0, N)
    edge_index = jnp.stack([src, dst])                 # [2, E]

    def glorot(k, shape):
        lim = (6.0 / (shape[0] + shape[-1])) ** 0.5
        return jax.random.uniform(k, shape, jnp.float32, -lim, lim)

    params = {
        # conv1: GATConv(F_IN, 16, heads=8)
        "W1": glorot(ks[3], (F_IN, 8 * 16)),
        "a_src1": glorot(ks[4], (8, 16)),
        "a_dst1": glorot(ks[5], (8, 16)),
        "b1": jnp.zeros((1, 8 * 16), jnp.float32),
        # conv2: GATConv(128, 2, heads=1, concat=False); attention vectors unused
        # because edge_index=None -> self-loop-only softmax == 1.
        "W2": glorot(ks[6], (8 * 16, 2)),
        "a_src2": glorot(ks[7], (1, 2)),
        "a_dst2": glorot(ks[8], (1, 2)),
        "b2": jnp.zeros((1, 2), jnp.float32),
    }

    out = gnn_forward(x, edge_index, params)
    jax.block_until_ready(out)
    assert out.shape == (N, 2) and out.dtype == jnp.float32

    ref = _reference_forward(x, edge_index, params)
    assert jnp.allclose(out, ref, rtol=2e-2, atol=2e-2), (
        "max abs diff = %f" % float(jnp.max(jnp.abs(out - ref))))
    print("KERNEL_OK")
</pallas_src>

<mosaic_0001>
module attributes {stable_mosaic.version = 11 : i64} {
  func.func @_gat_attention_kernel(%arg0: i32, %arg1: i32, %arg2: memref<8x16xf32, #tpu.memory_space<vmem>>, %arg3: memref<8x16xf32, #tpu.memory_space<vmem>>, %arg4: memref<16x16xi8, #tpu.memory_space<vmem>>, %arg5: memref<8x16x16xbf16, #tpu.memory_space<vmem>>, %arg6: memref<8x128xbf16, #tpu.memory_space<vmem>>, %arg7: memref<8x16xf32, #tpu.memory_space<vmem>>, %arg8: memref<8x1xf32, #tpu.memory_space<vmem>>, %arg9: memref<8x16xf32, #tpu.memory_space<vmem>>, %arg10: memref<8x1x16xf32, #tpu.memory_space<vmem>>, %arg11: memref<8x1x16xf32, #tpu.memory_space<vmem>>, %arg12: memref<8x16x16xf32, #tpu.memory_space<vmem>>) attributes {dimension_semantics = [#tpu.dimension_semantics<parallel>, #tpu.dimension_semantics<arbitrary>], iteration_bounds = array<i64: 1, 1>, scalar_prefetch = 0 : i64, scratch_operands = 3 : i64, tpu.core_type = #tpu.core_type<tc>, window_params = [{transform_indices = @transform_0, window_bounds = array<i64: 8, 16>}, {transform_indices = @transform_1, window_bounds = array<i64: 8, 16>}, {transform_indices = @transform_2, window_bounds = array<i64: 16, 16>}, {transform_indices = @transform_3, window_bounds = array<i64: 8, 16, 16>}, {pipeline_mode = #tpu.pipeline_mode<synchronous>, transform_indices = @transform_4, window_bounds = array<i64: 8, 128>}, {pipeline_mode = #tpu.pipeline_mode<synchronous>, transform_indices = @transform_5, window_bounds = array<i64: 8, 16>}, {pipeline_mode = #tpu.pipeline_mode<synchronous>, transform_indices = @transform_6, window_bounds = array<i64: 8, 1>}, {transform_indices = @transform_7, window_bounds = array<i64: 8, 16>}]} {
    %c0_i32 = arith.constant 0 : i32
    %0 = arith.cmpi eq, %arg1, %c0_i32 : i32
    %1 = arith.extui %0 : i1 to i32
    %c0_i32_0 = arith.constant 0 : i32
    %2 = arith.cmpi ne, %1, %c0_i32_0 : i32
    scf.if %2 {
      %cst_35 = arith.constant 0xFF800000 : f32
      %51 = vector.broadcast %cst_35 : f32 to vector<8x1x16xf32>
      %c0_36 = arith.constant 0 : index
      %c0_37 = arith.constant 0 : index
      %c0_38 = arith.constant 0 : index
      %52 = vector.load %arg10[%c0_36, %c0_37, %c0_38] : memref<8x1x16xf32, #tpu.memory_space<vmem>>, vector<8x1x16xf32>
      tpu.vector_store %arg10[%c0_36, %c0_37, %c0_38], %51 {strides = array<i32>} : memref<8x1x16xf32, #tpu.memory_space<vmem>>, vector<8x1x16xf32>,
      %cst_39 = arith.constant 0.000000e+00 : f32
      %53 = vector.broadcast %cst_39 : f32 to vector<8x1x16xf32>
      %c0_40 = arith.constant 0 : index
      %c0_41 = arith.constant 0 : index
      %c0_42 = arith.constant 0 : index
      %54 = vector.load %arg11[%c0_40, %c0_41, %c0_42] : memref<8x1x16xf32, #tpu.memory_space<vmem>>, vector<8x1x16xf32>
      tpu.vector_store %arg11[%c0_40, %c0_41, %c0_42], %53 {strides = array<i32>} : memref<8x1x16xf32, #tpu.memory_space<vmem>>, vector<8x1x16xf32>,
      %cst_43 = arith.constant 0.000000e+00 : f32
      %55 = vector.broadcast %cst_43 : f32 to vector<8x16x16xf32>
      %c0_44 = arith.constant 0 : index
      %c0_45 = arith.constant 0 : index
      %c0_46 = arith.constant 0 : index
      %56 = vector.load %arg12[%c0_44, %c0_45, %c0_46] : memref<8x16x16xf32, #tpu.memory_space<vmem>>, vector<8x16x16xf32>
      tpu.vector_store %arg12[%c0_44, %c0_45, %c0_46], %55 {strides = array<i32>} : memref<8x16x16xf32, #tpu.memory_space<vmem>>, vector<8x16x16xf32>,
    } else {
    }
    %c0 = arith.constant 0 : index
    %c0_1 = arith.constant 0 : index
    %3 = vector.load %arg2[%c0, %c0_1] : memref<8x16xf32, #tpu.memory_space<vmem>>, vector<8x16xf32>
    %c0_2 = arith.constant 0 : index
    %c0_3 = arith.constant 0 : index
    %4 = vector.load %arg3[%c0_2, %c0_3] : memref<8x16xf32, #tpu.memory_space<vmem>>, vector<8x16xf32>
    %5 = vector.shape_cast %3 : vector<8x16xf32> to vector<8x16x1xf32>
    %6 = vector.shape_cast %4 : vector<8x16xf32> to vector<8x1x16xf32>
    %7 = vector.broadcast %5 : vector<8x16x1xf32> to vector<8x16x16xf32>
    %8 = vector.broadcast %6 : vector<8x1x16xf32> to vector<8x16x16xf32>
    %9 = arith.addf %7, %8 : vector<8x16x16xf32>
    %cst = arith.constant 0.000000e+00 : f32
    %10 = vector.broadcast %cst : f32 to vector<8x16x16xf32>
    %11 = arith.cmpf ogt, %9, %10 : vector<8x16x16xf32>
    %cst_4 = arith.constant 2.000000e-01 : f32
    %12 = vector.broadcast %cst_4 : f32 to vector<8x16x16xf32>
    %13 = arith.mulf %12, %9 : vector<8x16x16xf32>
    %14 = arith.select %11, %9, %13 : vector<8x16x16xi1>, vector<8x16x16xf32>
    %c0_5 = arith.constant 0 : index
    %c0_6 = arith.constant 0 : index
    %15 = vector.load %arg4[%c0_5, %c0_6] : memref<16x16xi8, #tpu.memory_space<vmem>>, vector<16x16xi8>
    %16 = arith.sitofp %15 : vector<16x16xi8> to vector<16x16xf32>
    %cst_7 = arith.constant 1.000000e+00 : f32
    %17 = vector.broadcast %cst_7 : f32 to vector<16x16xf32>
    %18 = arith.subf %16, %17 : vector<16x16xf32>
    %cst_8 = arith.constant 1.000000e+30 : f32
    %19 = vector.broadcast %cst_8 : f32 to vector<16x16xf32>
    %20 = arith.mulf %18, %19 : vector<16x16xf32>
    %21 = vector.shape_cast %20 : vector<16x16xf32> to vector<1x16x16xf32>
    %22 = vector.broadcast %21 : vector<1x16x16xf32> to vector<8x16x16xf32>
    %23 = arith.addf %14, %22 : vector<8x16x16xf32>
    %c0_9 = arith.constant 0 : index
    %c0_10 = arith.constant 0 : index
    %c0_11 = arith.constant 0 : index
    %24 = vector.load %arg10[%c0_9, %c0_10, %c0_11] : memref<8x1x16xf32, #tpu.memory_space<vmem>>, vector<8x1x16xf32>
    %cst_12 = arith.constant dense<0xFF800000> : vector<8x16xf32>
    %25 = vector.multi_reduction <maximumf>, %23, %cst_12 [1] : vector<8x16x16xf32> to vector<8x16xf32>
    %26 = vector.shape_cast %25 : vector<8x16xf32> to vector<8x1x16xf32>
    %27 = arith.maximumf %24, %26 : vector<8x1x16xf32>
    %28 = arith.subf %24, %27 : vector<8x1x16xf32>
    %29 = math.exp %28 : vector<8x1x16xf32>
    %30 = vector.broadcast %27 : vector<8x1x16xf32> to vector<8x16x16xf32>
    %31 = arith.subf %23, %30 : vector<8x16x16xf32>
    %32 = math.exp %31 : vector<8x16x16xf32>
    %c0_13 = arith.constant 0 : index
    %c0_14 = arith.constant 0 : index
    %c0_15 = arith.constant 0 : index
    %33 = vector.load %arg11[%c0_13, %c0_14, %c0_15] : memref<8x1x16xf32, #tpu.memory_space<vmem>>, vector<8x1x16xf32>
    %34 = arith.mulf %29, %33 : vector<8x1x16xf32>
    %cst_16 = arith.constant dense<0.000000e+00> : vector<8x16xf32>
    %35 = vector.multi_reduction <add>, %32, %cst_16 [1] : vector<8x16x16xf32> to vector<8x16xf32>
    %36 = vector.shape_cast %35 : vector<8x16xf32> to vector<8x1x16xf32>
    %37 = arith.addf %34, %36 : vector<8x1x16xf32>
    %c0_17 = arith.constant 0 : index
    %c0_18 = arith.constant 0 : index
    %c0_19 = arith.constant 0 : index
    %38 = vector.load %arg11[%c0_17, %c0_18, %c0_19] : memref<8x1x16xf32, #tpu.memory_space<vmem>>, vector<8x1x16xf32>
    tpu.vector_store %arg11[%c0_17, %c0_18, %c0_19], %37 {strides = array<i32>} : memref<8x1x16xf32, #tpu.memory_space<vmem>>, vector<8x1x16xf32>,
    %c0_20 = arith.constant 0 : index
    %c0_21 = arith.constant 0 : index
    %c0_22 = arith.constant 0 : index
    %39 = vector.load %arg12[%c0_20, %c0_21, %c0_22] : memref<8x16x16xf32, #tpu.memory_space<vmem>>, vector<8x16x16xf32>
    %40 = vector.broadcast %29 : vector<8x1x16xf32> to vector<8x16x16xf32>
    %41 = arith.mulf %40, %39 : vector<8x16x16xf32>
    %c0_23 = arith.constant 0 : index
    %c0_24 = arith.constant 0 : index
    %c0_25 = arith.constant 0 : index
    %42 = vector.load %arg5[%c0_23, %c0_24, %c0_25] : memref<8x16x16xbf16, #tpu.memory_space<vmem>>, vector<8x16x16xbf16>
    %43 = arith.truncf %32 : vector<8x16x16xf32> to vector<8x16x16xbf16>
    "tpu.trace_start"() <{level = 10 : i32, message = "hck,hkm->hcm"}> : () -> ()
    %cst_26 = arith.constant dense<0.000000e+00> : vector<8x16x16xf32>
    %44 = tpu.matmul %42, %43, %cst_26 {dimension_numbers = #tpu.dot_dimension_numbers<[2], [1], [1], [2], [0, 0, 0, 1, 1, 2], [0], [0]>} : vector<8x16x16xbf16>, vector<8x16x16xbf16>, vector<8x16x16xf32> -> vector<8x16x16xf32>
    "tpu.trace_stop"() : () -> ()
    %45 = arith.addf %41, %44 : vector<8x16x16xf32>
    %c0_27 = arith.constant 0 : index
    %c0_28 = arith.constant 0 : index
    %c0_29 = arith.constant 0 : index
    %46 = vector.load %arg12[%c0_27, %c0_28, %c0_29] : memref<8x16x16xf32, #tpu.memory_space<vmem>>, vector<8x16x16xf32>
    tpu.vector_store %arg12[%c0_27, %c0_28, %c0_29], %45 {strides = array<i32>} : memref<8x16x16xf32, #tpu.memory_space<vmem>>, vector<8x16x16xf32>,
    %c0_30 = arith.constant 0 : index
    %c0_31 = arith.constant 0 : index
    %c0_32 = arith.constant 0 : index
    %47 = vector.load %arg10[%c0_30, %c0_31, %c0_32] : memref<8x1x16xf32, #tpu.memory_space<vmem>>, vector<8x1x16xf32>
    tpu.vector_store %arg10[%c0_30, %c0_31, %c0_32], %27 {strides = array<i32>} : memref<8x1x16xf32, #tpu.memory_space<vmem>>, vector<8x1x16xf32>,
    %c0_i32_33 = arith.constant 0 : i32
    %48 = arith.cmpi eq, %arg1, %c0_i32_33 : i32
    %49 = arith.extui %48 : i1 to i32
    %c0_i32_34 = arith.constant 0 : i32
    %50 = arith.cmpi ne, %49, %c0_i32_34 : i32
    scf.if %50 {
      %c0_35 = arith.constant 0 : index
      %c0_36 = arith.constant 0 : index
      %c0_37 = arith.constant 0 : index
      %51 = vector.load %arg11[%c0_35, %c0_36, %c0_37] : memref<8x1x16xf32, #tpu.memory_space<vmem>>, vector<8x1x16xf32>
      %52 = tpu.reciprocal %51 {approx = true} : vector<8x1x16xf32> -> vector<8x1x16xf32>
      %c0_38 = arith.constant 0 : index
      %c0_39 = arith.constant 0 : index
      %c0_40 = arith.constant 0 : index
      %53 = vector.load %arg12[%c0_38, %c0_39, %c0_40] : memref<8x16x16xf32, #tpu.memory_space<vmem>>, vector<8x16x16xf32>
      %54 = vector.broadcast %52 : vector<8x1x16xf32> to vector<8x16x16xf32>
      %55 = arith.mulf %53, %54 : vector<8x16x16xf32>
      %c0_41 = arith.constant 0 : index
      %c0_42 = arith.constant 0 : index
      %56 = vector.load %arg7[%c0_41, %c0_42] : memref<8x16xf32, #tpu.memory_space<vmem>>, vector<8x16xf32>
      %57 = vector.shape_cast %56 : vector<8x16xf32> to vector<8x16x1xf32>
      %58 = vector.broadcast %57 : vector<8x16x1xf32> to vector<8x16x16xf32>
      %59 = arith.addf %55, %58 : vector<8x16x16xf32>
      %cst_43 = arith.constant 0.000000e+00 : f32
      %60 = vector.broadcast %cst_43 : f32 to vector<8x16x16xf32>
      %61 = arith.cmpf ogt, %59, %60 : vector<8x16x16xf32>
      %cst_44 = arith.constant 0.000000e+00 : f32
      %62 = vector.broadcast %cst_44 : f32 to vector<8x16x16xf32>
      %63 = arith.minimumf %59, %62 : vector<8x16x16xf32>
      %64 = math.exp %63 : vector<8x16x16xf32>
      %cst_45 = arith.constant 1.000000e+00 : f32
      %65 = vector.broadcast %cst_45 : f32 to vector<8x16x16xf32>
      %66 = arith.subf %64, %65 : vector<8x16x16xf32>
      %67 = arith.select %61, %59, %66 : vector<8x16x16xi1>, vector<8x16x16xf32>
      %68 = vector.shape_cast %67 : vector<8x16x16xf32> to vector<128x16xf32>
      %c0_46 = arith.constant 0 : index
      %c0_47 = arith.constant 0 : index
      %69 = vector.load %arg6[%c0_46, %c0_47] : memref<8x128xbf16, #tpu.memory_space<vmem>>, vector<8x128xbf16>
      %70 = arith.truncf %68 : vector<128x16xf32> to vector<128x16xbf16>
      %cst_48 = arith.constant dense<0.000000e+00> : vector<8x16xf32>
      %71 = tpu.matmul %69, %70, %cst_48 {dimension_numbers = #tpu.dot_dimension_numbers<[1], [0], [0], [1], [0, 0, 1, 1], [], []>} : vector<8x128xbf16>, vector<128x16xbf16>, vector<8x16xf32> -> vector<8x16xf32>
      %c0_49 = arith.constant 0 : index
      %c0_50 = arith.constant 0 : index
      %72 = vector.load %arg8[%c0_49, %c0_50] : memref<8x1xf32, #tpu.memory_space<vmem>>, vector<8x1xf32>
      %73 = vector.broadcast %72 : vector<8x1xf32> to vector<8x16xf32>
      %74 = arith.addf %71, %73 : vector<8x16xf32>
      %cst_51 = arith.constant 0.000000e+00 : f32
      %75 = vector.broadcast %cst_51 : f32 to vector<8x16xf32>
      %76 = arith.cmpf ogt, %74, %75 : vector<8x16xf32>
      %cst_52 = arith.constant 0.000000e+00 : f32
      %77 = vector.broadcast %cst_52 : f32 to vector<8x16xf32>
      %78 = arith.minimumf %74, %77 : vector<8x16xf32>
      %79 = math.exp %78 : vector<8x16xf32>
      %cst_53 = arith.constant 1.000000e+00 : f32
      %80 = vector.broadcast %cst_53 : f32 to vector<8x16xf32>
      %81 = arith.subf %79, %80 : vector<8x16xf32>
      %82 = arith.select %76, %74, %81 : vector<8x16xi1>, vector<8x16xf32>
      %c0_54 = arith.constant 0 : index
      %c0_55 = arith.constant 0 : index
      %83 = vector.load %arg9[%c0_54, %c0_55] : memref<8x16xf32, #tpu.memory_space<vmem>>, vector<8x16xf32>
      tpu.vector_store %arg9[%c0_54, %c0_55], %82 {strides = array<i32>} : memref<8x16xf32, #tpu.memory_space<vmem>>, vector<8x16xf32>,
    } else {
    }
    return
  }
  func.func @transform_0(%arg0: i32, %arg1: i32) -> (i32, i32) {
    %c0_i32 = arith.constant 0 : i32
    %c0_i32_0 = arith.constant 0 : i32
    return %c0_i32, %arg1 : i32, i32
  }
  func.func @transform_1(%arg0: i32, %arg1: i32) -> (i32, i32) {
    %c0_i32 = arith.constant 0 : i32
    %c0_i32_0 = arith.constant 0 : i32
    return %c0_i32, %arg0 : i32, i32
  }
  func.func @transform_2(%arg0: i32, %arg1: i32) -> (i32, i32) {
    %c0_i32 = arith.constant 0 : i32
    return %arg1, %arg0 : i32, i32
  }
  func.func @transform_3(%arg0: i32, %arg1: i32) -> (i32, i32, i32) {
    %c0_i32 = arith.constant 0 : i32
    %c0_i32_0 = arith.constant 0 : i32
    %c0_i32_1 = arith.constant 0 : i32
    return %c0_i32, %c0_i32_0, %arg1 : i32, i32, i32
  }
  func.func @transform_4(%arg0: i32, %arg1: i32) -> (i32, i32) {
    %c0_i32 = arith.constant 0 : i32
    %c0_i32_0 = arith.constant 0 : i32
    %c0_i32_1 = arith.constant 0 : i32
    return %c0_i32, %c0_i32_0 : i32, i32
  }
  func.func @transform_5(%arg0: i32, %arg1: i32) -> (i32, i32) {
    %c0_i32 = arith.constant 0 : i32
    %c0_i32_0 = arith.constant 0 : i32
    %c0_i32_1 = arith.constant 0 : i32
    return %c0_i32, %c0_i32_0 : i32, i32
  }
  func.func @transform_6(%arg0: i32, %arg1: i32) -> (i32, i32) {
    %c0_i32 = arith.constant 0 : i32
    %c0_i32_0 = arith.constant 0 : i32
    %c0_i32_1 = arith.constant 0 : i32
    return %c0_i32, %c0_i32_0 : i32, i32
  }
  func.func @transform_7(%arg0: i32, %arg1: i32) -> (i32, i32) {
    %c0_i32 = arith.constant 0 : i32
    %c0_i32_0 = arith.constant 0 : i32
    return %c0_i32, %arg0 : i32, i32
  }
}

</mosaic_0001>

<llo_original>
// kernel: tpu_custom_call.1
$region0: #{tpu_custom_call.1}
  #allocation0 [shape = 'u32[]', space=smem, size = 0x4, offset = 0x4, fixed_abs, tag = 'smem constant byte address 0x4 - core index']
  #allocation1 [shape = 'u32[144,128]{1,0:T(1,128)}', space=vmem, size = 0x12000, scoped, tag = 'internal scratch']
  #allocation2 [shape = 'f32[8,1,16]{2,1,0:T(1,128)}', space=vmem, size = 0x1000, scoped, tag = 'scratch operand']
  #allocation3 [shape = 'f32[8,1,16]{2,1,0:T(1,128)}', space=vmem, size = 0x1000, scoped, tag = 'scratch operand']
  #allocation4 [shape = 'f32[8,16,16]{2,1,0:T(8,128)}', space=vmem, size = 0x10000, scoped, tag = 'scratch operand']
  %s0 = inlined_call_operand.vmem [shape: f32[8,16], index: 0, kind: input, shape index: {}]
  %s1 = inlined_call_operand.hbm [shape: f32[8,16], index: 1, kind: input, shape index: {}]
  %s2 = inlined_call_operand.hbm [shape: s8[16,16], index: 2, kind: input, shape index: {}]
  %s3 = inlined_call_operand.hbm [shape: bf16[8,16,16], index: 3, kind: input, shape index: {}]
  %s4 = inlined_call_operand.vmem [shape: bf16[8,128], index: 4, kind: input, shape index: {}]
  %s5 = inlined_call_operand.vmem [shape: f32[8,16], index: 5, kind: input, shape index: {}]
  %s6 = inlined_call_operand.vmem [shape: f32[8,1], index: 6, kind: input, shape index: {}]
  %s7 = inlined_call_operand.hbm [shape: f32[8,16], index: 7, kind: output, shape index: {}]
  %s8 = sld [smem:[#allocation0]]
  $region58: #{tpu_custom_call.1} parent=0
    _
  %s10 = ssub.s32 1, %s8
  %s11 = scalar_select 0, %s10, %s8
  $region1: #{tpu_custom_call.1} parent=0
    #allocation5 [shape = 'u8[4096]{0}', space=vmem, size = 0x1000, scoped, tag = 'input window, operand 1, single buffered']
    #allocation6 [shape = 's32[1]{0}', space=sflag, size = 0x4, scoped, tag = 'scoped memory for tpu_custom_call.1']
    #allocation7 [shape = 's32[1]{0}', space=sflag, size = 0x4, scoped, tag = 'scoped memory for tpu_custom_call.1']
    #allocation8 [shape = 'u8[2048]{0}', space=vmem, size = 0x800, scoped, tag = 'input window, operand 2, single buffered']
    #allocation9 [shape = 's32[1]{0}', space=sflag, size = 0x4, scoped, tag = 'scoped memory for tpu_custom_call.1']
    #allocation10 [shape = 'u8[32768]{0}', space=vmem, size = 0x8000, scoped, tag = 'input window, operand 3, single buffered']
    #allocation11 [shape = 'u8[4096]{0}', space=vmem, size = 0x1000, scoped, tag = 'output window, operand 0, single buffered']
    %12 = vsyncpa [#allocation6], 0
    %13 = vsyncpa [#allocation9], 0
    %14 = vsyncpa [#allocation7], 0
    // Predicated region
    $region2: #{tpu_custom_call.1} parent=1 // pred_check
      _
    $region3: #{tpu_custom_call.1} parent=1 // pred_check_branch
      %16 = sbr.rel (0) target = $region5
    $region4: #{tpu_custom_call.1} parent=1 // pred_region
      _
    $region5: #{tpu_custom_call.1} parent=1 // pred_fallthru
      _
    // Predicated region
    $region6: #{tpu_custom_call.1} parent=1 // pred_check
      _
    $region7: #{tpu_custom_call.1} parent=1 // pred_check_branch
      %18 = sbr.rel (0) target = $region9
    $region8: #{tpu_custom_call.1} parent=1 // pred_region
      %s20 = ssub.s32 128, 128
      %21 = vsyncadd [#allocation6], %s20
      %s23 = sshll.u32 [#allocation5], 4
      %s24 = int_to_ptr.vmem [resolvable:$true] %s23
      %26 = dma.hbm_to_vmem [thread:$0]  %s1, 128, %s24, [#allocation6]
    $region9: #{tpu_custom_call.1} parent=1 // pred_fallthru
      _
    // Predicated region
    $region10: #{tpu_custom_call.1} parent=1 // pred_check
      _
    $region11: #{tpu_custom_call.1} parent=1 // pred_check_branch
      %28 = sbr.rel (0) target = $region13
    $region12: #{tpu_custom_call.1} parent=1 // pred_region
      %s30 = ssub.s32 64, 64
      %31 = vsyncadd [#allocation9], %s30
      %s32 = sshll.u32 [#allocation8], 4
      %s33 = int_to_ptr.vmem [resolvable:$true] %s32
      %38 = dma.hbm_to_vmem [thread:$0]  %s2, 64, %s33, [#allocation9], 32, 32, 2
    $region13: #{tpu_custom_call.1} parent=1 // pred_fallthru
      _
    // Predicated region
    $region14: #{tpu_custom_call.1} parent=1 // pred_check
      _
    $region15: #{tpu_custom_call.1} parent=1 // pred_check_branch
      %40 = sbr.rel (0) target = $region17
    $region16: #{tpu_custom_call.1} parent=1 // pred_region
      %s42 = ssub.s32 1024, 1024
      %43 = vsyncadd [#allocation9], %s42
      %s44 = sshll.u32 [#allocation10], 4
      %s45 = int_to_ptr.vmem [resolvable:$true] %s44
      %50 = dma.hbm_to_vmem [thread:$0]  %s3, 1024, %s45, [#allocation9], 64, 64, 4
    $region17: #{tpu_custom_call.1} parent=1 // pred_fallthru
      _
    // Predicated region
    $region18: #{tpu_custom_call.1} parent=1 // pred_check
      _
    $region19: #{tpu_custom_call.1} parent=1 // pred_check_branch
      %52 = sbr.rel (0) target = $region21
    $region20: #{tpu_custom_call.1} parent=1 // pred_region
      _
    $region21: #{tpu_custom_call.1} parent=1 // pred_fallthru
      _
    // Predicated region
    $region22: #{tpu_custom_call.1} parent=1 // pred_check
      _
    $region23: #{tpu_custom_call.1} parent=1 // pred_check_branch
      %54 = sbr.rel (0) target = $region25
    $region24: #{tpu_custom_call.1} parent=1 // pred_region
      _
    $region25: #{tpu_custom_call.1} parent=1 // pred_fallthru
      _
    // Predicated region
    $region26: #{tpu_custom_call.1} parent=1 // pred_check
      _
    $region27: #{tpu_custom_call.1} parent=1 // pred_check_branch
      %56 = sbr.rel (0) target = $region29
    $region28: #{tpu_custom_call.1} parent=1 // pred_region
      _
    $region29: #{tpu_custom_call.1} parent=1 // pred_fallthru
      _
    // Predicated region
    $region30: #{tpu_custom_call.1} parent=1 // pred_check
      _
    $region31: #{tpu_custom_call.1} parent=1 // pred_check_branch
      %58 = sbr.rel (0) target = $region33
    $region32: #{tpu_custom_call.1} parent=1 // pred_region
      %59 = dma.done [#allocation6], 128
    $region33: #{tpu_custom_call.1} parent=1 // pred_fallthru
      _
    // Predicated region
    $region34: #{tpu_custom_call.1} parent=1 // pred_check
      _
    $region35: #{tpu_custom_call.1} parent=1 // pred_check_branch
      %61 = sbr.rel (0) target = $region37
    $region36: #{tpu_custom_call.1} parent=1 // pred_region
      %62 = dma.done [#allocation9], 64
    $region37: #{tpu_custom_call.1} parent=1 // pred_fallthru
      _
    // Predicated region
    $region38: #{tpu_custom_call.1} parent=1 // pred_check
      _
    $region39: #{tpu_custom_call.1} parent=1 // pred_check_branch
      %64 = sbr.rel (0) target = $region41
    $region40: #{tpu_custom_call.1} parent=1 // pred_region
      %65 = dma.done [#allocation9], 1024
    $region41: #{tpu_custom_call.1} parent=1 // pred_fallthru
      _
    %p67 = scmp.eq.s32.totalorder 0, 0
    // Predicated region
    $region42: #{tpu_custom_call.1} parent=1 // pred_check
      %p68 = pneg %p67
    $region43: #{tpu_custom_call.1} parent=1 // pred_check_branch
      %70 = sbr.rel (%p68) target = $region45
    $region44: #{tpu_custom_call.1} parent=1 // pred_region
      %vm71 = vcmask 122880
      %72 = vst.msk [vmem:[#allocation2] sm:$0x1] %vm71, -inf
      %73 = vst.msk [vmem:[#allocation2 + $0x1] sm:$0x1] %vm71, -inf
      %74 = vst.msk [vmem:[#allocation2 + $0x2] sm:$0x1] %vm71, -inf
      %75 = vst.msk [vmem:[#allocation2 + $0x3] sm:$0x1] %vm71, -inf
      %76 = vst.msk [vmem:[#allocation2 + $0x4] sm:$0x1] %vm71, -inf
      %77 = vst.msk [vmem:[#allocation2 + $0x5] sm:$0x1] %vm71, -inf
      %78 = vst.msk [vmem:[#allocation2 + $0x6] sm:$0x1] %vm71, -inf
      %79 = vst.msk [vmem:[#allocation2 + $0x7] sm:$0x1] %vm71, -inf
      %80 = vst.msk [vmem:[#allocation3] sm:$0x1] %vm71, 0.0
      %81 = vst.msk [vmem:[#allocation3 + $0x1] sm:$0x1] %vm71, 0.0
      %82 = vst.msk [vmem:[#allocation3 + $0x2] sm:$0x1] %vm71, 0.0
      %83 = vst.msk [vmem:[#allocation3 + $0x3] sm:$0x1] %vm71, 0.0
      %84 = vst.msk [vmem:[#allocation3 + $0x4] sm:$0x1] %vm71, 0.0
      %85 = vst.msk [vmem:[#allocation3 + $0x5] sm:$0x1] %vm71, 0.0
      %86 = vst.msk [vmem:[#allocation3 + $0x6] sm:$0x1] %vm71, 0.0
      %87 = vst.msk [vmem:[#allocation3 + $0x7] sm:$0x1] %vm71, 0.0
      %vm88 = vcmask 130048
      %89 = vst.msk [vmem:[#allocation4] sm:$0xff] %vm88, 0.0
      %90 = vst.msk [vmem:[#allocation4 + $0x8] sm:$0xff] %vm88, 0.0
      %91 = vst.msk [vmem:[#allocation4 + $0x10] sm:$0xff] %vm88, 0.0
      %92 = vst.msk [vmem:[#allocation4 + $0x18] sm:$0xff] %vm88, 0.0
      %93 = vst.msk [vmem:[#allocation4 + $0x20] sm:$0xff] %vm88, 0.0
      %94 = vst.msk [vmem:[#allocation4 + $0x28] sm:$0xff] %vm88, 0.0
      %95 = vst.msk [vmem:[#allocation4 + $0x30] sm:$0xff] %vm88, 0.0
      %96 = vst.msk [vmem:[#allocation4 + $0x38] sm:$0xff] %vm88, 0.0
      %97 = vst.msk [vmem:[#allocation4 + $0x40] sm:$0xff] %vm88, 0.0
      %98 = vst.msk [vmem:[#allocation4 + $0x48] sm:$0xff] %vm88, 0.0
      %99 = vst.msk [vmem:[#allocation4 + $0x50] sm:$0xff] %vm88, 0.0
      %100 = vst.msk [vmem:[#allocation4 + $0x58] sm:$0xff] %vm88, 0.0
      %101 = vst.msk [vmem:[#allocation4 + $0x60] sm:$0xff] %vm88, 0.0
      %102 = vst.msk [vmem:[#allocation4 + $0x68] sm:$0xff] %vm88, 0.0
      %103 = vst.msk [vmem:[#allocation4 + $0x70] sm:$0xff] %vm88, 0.0
      %104 = vst.msk [vmem:[#allocation4 + $0x78] sm:$0xff] %vm88, 0.0
    $region45: #{tpu_custom_call.1} parent=1 // pred_fallthru
      _
    %v105 = vld [vmem:[%s0] sm:$0xff]
    %v106 = vld [vmem:[#allocation5] sm:$0xff]
    %v107 = vlaneseq
    %v108 = vshrl.u32 %v107, 7
    %v109 = vsub.s32 0, %v108
    %v110 = vrot.slane %v105, %v109
    %112 = vbcast.lane.b32.xlu0 %v110, 256
    %v113 = vpop.permute.xlu0 %112
    %s115 = sor.u32 256, 8
    %116 = vbcast.lane.b32.xlu0 %v110, %s115
    %v117 = vpop.permute.xlu0 %116
    %v118 = vlaneseq
    %v119 = vshrl.u32 %v118, 7
    %v120 = vsub.s32 1, %v119
    %v121 = vrot.slane %v105, %v120
    %123 = vbcast.lane.b32.xlu0 %v121, 256
    %v124 = vpop.permute.xlu0 %123
    %s126 = sor.u32 256, 8
    %127 = vbcast.lane.b32.xlu0 %v121, %s126
    %v128 = vpop.permute.xlu0 %127
    %v129 = vlaneseq
    %v130 = vshrl.u32 %v129, 7
    %v131 = vsub.s32 2, %v130
    %v132 = vrot.slane %v105, %v131
    %134 = vbcast.lane.b32.xlu0 %v132, 256
    %v135 = vpop.permute.xlu0 %134
    %s137 = sor.u32 256, 8
    %138 = vbcast.lane.b32.xlu0 %v132, %s137
    %v139 = vpop.permute.xlu0 %138
    %v140 = vlaneseq
    %v141 = vshrl.u32 %v140, 7
    %v142 = vsub.s32 3, %v141
    %v143 = vrot.slane %v105, %v142
    %145 = vbcast.lane.b32.xlu0 %v143, 256
    %v146 = vpop.permute.xlu0 %145
    %s148 = sor.u32 256, 8
    %149 = vbcast.lane.b32.xlu0 %v143, %s148
    %v150 = vpop.permute.xlu0 %149
    %v151 = vlaneseq
    %v152 = vshrl.u32 %v151, 7
    %v153 = vsub.s32 4, %v152
    %v154 = vrot.slane %v105, %v153
    %156 = vbcast.lane.b32.xlu0 %v154, 256
    %v157 = vpop.permute.xlu0 %156
    %s159 = sor.u32 256, 8
    %160 = vbcast.lane.b32.xlu0 %v154, %s159
    %v161 = vpop.permute.xlu0 %160
    %v162 = vlaneseq
    %v163 = vshrl.u32 %v162, 7
    %v164 = vsub.s32 5, %v163
    %v165 = vrot.slane %v105, %v164
    %167 = vbcast.lane.b32.xlu0 %v165, 256
    %v168 = vpop.permute.xlu0 %167
    %s170 = sor.u32 256, 8
    %171 = vbcast.lane.b32.xlu0 %v165, %s170
    %v172 = vpop.permute.xlu0 %171
    %v173 = vlaneseq
    %v174 = vshrl.u32 %v173, 7
    %v175 = vsub.s32 6, %v174
    %v176 = vrot.slane %v105, %v175
    %178 = vbcast.lane.b32.xlu0 %v176, 256
    %v179 = vpop.permute.xlu0 %178
    %s181 = sor.u32 256, 8
    %182 = vbcast.lane.b32.xlu0 %v176, %s181
    %v183 = vpop.permute.xlu0 %182
    %v184 = vlaneseq
    %v185 = vshrl.u32 %v184, 7
    %v186 = vsub.s32 7, %v185
    %v187 = vrot.slane %v105, %v186
    %189 = vbcast.lane.b32.xlu0 %v187, 256
    %v190 = vpop.permute.xlu0 %189
    %s192 = sor.u32 256, 8
    %193 = vbcast.lane.b32.xlu0 %v187, %s192
    %v194 = vpop.permute.xlu0 %193
    %v196 = vcombine.high %v106, %v106
    %v198 = vunpack.c.l.s4 1966171168
    %v199 = vunpack.c.0.s8 %v198
    %v200 = vlaneseq
    %v201 = vshrl.u32 %v200, 7
    %v202 = vsub.s32 %v199, %v201
    %v203 = vrot.slane %v106, %v202
    %v205 = vunpack.c.l.s4 1966171168
    %v206 = vunpack.c.0.s8 %v205
    %v207 = vlaneseq
    %v208 = vshrl.u32 %v207, 7
    %v209 = vsub.s32 %v206, %v208
    %v210 = vrot.slane %v196, %v209
    %v211 = vcombine.high %v203, %v203
    %v212 = vcombine.high %v210, %v210
    %v214 = vunpack.c.l.s4 1966171168
    %v215 = vunpack.c.0.s8 %v214
    %v216 = vlaneseq
    %v217 = vshrl.u32 %v216, 7
    %v218 = vsub.s32 %v215, %v217
    %v219 = vrot.slane %v203, %v218
    %v221 = vunpack.c.l.s4 1966171168
    %v222 = vunpack.c.0.s8 %v221
    %v223 = vlaneseq
    %v224 = vshrl.u32 %v223, 7
    %v225 = vsub.s32 %v222, %v224
    %v226 = vrot.slane %v210, %v225
    %v228 = vunpack.c.l.s4 1966171168
    %v229 = vunpack.c.0.s8 %v228
    %v230 = vlaneseq
    %v231 = vshrl.u32 %v230, 7
    %v232 = vsub.s32 %v229, %v231
    %v233 = vrot.slane %v211, %v232
    %v235 = vunpack.c.l.s4 1966171168
    %v236 = vunpack.c.0.s8 %v235
    %v237 = vlaneseq
    %v238 = vshrl.u32 %v237, 7
    %v239 = vsub.s32 %v236, %v238
    %v240 = vrot.slane %v212, %v239
    %v241 = vcombine.high %v219, %v219
    %v242 = vcombine.high %v226, %v226
    %v243 = vcombine.high %v233, %v233
    %v244 = vcombine.high %v240, %v240
    %v245 = vlaneseq
    %v246 = vshrl.u32 %v245, 7
    %v247 = vsub.s32 0, %v246
    %v248 = vrot.slane %v219, %v247
    %v249 = vlaneseq
    %v250 = vshrl.u32 %v249, 7
    %v251 = vsub.s32 0, %v250
    %v252 = vrot.slane %v233, %v251
    %v253 = vlaneseq
    %v254 = vshrl.u32 %v253, 7
    %v255 = vsub.s32 0, %v254
    %v256 = vrot.slane %v241, %v255
    %v257 = vlaneseq
    %v258 = vshrl.u32 %v257, 7
    %v259 = vsub.s32 0, %v258
    %v260 = vrot.slane %v243, %v259
    %v261 = vlaneseq
    %v262 = vshrl.u32 %v261, 7
    %v263 = vsub.s32 0, %v262
    %v264 = vrot.slane %v226, %v263
    %v265 = vlaneseq
    %v266 = vshrl.u32 %v265, 7
    %v267 = vsub.s32 0, %v266
    %v268 = vrot.slane %v240, %v267
    %v269 = vlaneseq
    %v270 = vshrl.u32 %v269, 7
    %v271 = vsub.s32 0, %v270
    %v272 = vrot.slane %v242, %v271
    %v273 = vlaneseq
    %v274 = vshrl.u32 %v273, 7
    %v275 = vsub.s32 0, %v274
    %v276 = vrot.slane %v244, %v275
    %v285 = vadd.f32 %v113, %v248
    %v286 = vadd.f32 %v117, %v248
    %v287 = vadd.f32 %v124, %v252
    %v288 = vadd.f32 %v128, %v252
    %v289 = vadd.f32 %v135, %v256
    %v290 = vadd.f32 %v139, %v256
    %v291 = vadd.f32 %v146, %v260
    %v292 = vadd.f32 %v150, %v260
    %v293 = vadd.f32 %v157, %v264
    %v294 = vadd.f32 %v161, %v264
    %v295 = vadd.f32 %v168, %v268
    %v296 = vadd.f32 %v172, %v268
    %v297 = vadd.f32 %v179, %v272
    %v298 = vadd.f32 %v183, %v272
    %v299 = vadd.f32 %v190, %v276
    %v300 = vadd.f32 %v194, %v276
    %vm301 = vcmp.gt.f32.partialorder %v285, 0.0
    %vm302 = vcmp.gt.f32.partialorder %v286, 0.0
    %vm303 = vcmp.gt.f32.partialorder %v287, 0.0
    %vm304 = vcmp.gt.f32.partialorder %v288, 0.0
    %vm305 = vcmp.gt.f32.partialorder %v289, 0.0
    %vm306 = vcmp.gt.f32.partialorder %v290, 0.0
    %vm307 = vcmp.gt.f32.partialorder %v291, 0.0
    %vm308 = vcmp.gt.f32.partialorder %v292, 0.0
    %vm309 = vcmp.gt.f32.partialorder %v293, 0.0
    %vm310 = vcmp.gt.f32.partialorder %v294, 0.0
    %vm311 = vcmp.gt.f32.partialorder %v295, 0.0
    %vm312 = vcmp.gt.f32.partialorder %v296, 0.0
    %vm313 = vcmp.gt.f32.partialorder %v297, 0.0
    %vm314 = vcmp.gt.f32.partialorder %v298, 0.0
    %vm315 = vcmp.gt.f32.partialorder %v299, 0.0
    %vm316 = vcmp.gt.f32.partialorder %v300, 0.0
    %v317 = vmul.f32 %v285, 0.2
    %v318 = vmul.f32 %v286, 0.2
    %v319 = vmul.f32 %v287, 0.2
    %v320 = vmul.f32 %v288, 0.2
    %v321 = vmul.f32 %v289, 0.2
    %v322 = vmul.f32 %v290, 0.2
    %v323 = vmul.f32 %v291, 0.2
    %v324 = vmul.f32 %v292, 0.2
    %v325 = vmul.f32 %v293, 0.2
    %v326 = vmul.f32 %v294, 0.2
    %v327 = vmul.f32 %v295, 0.2
    %v328 = vmul.f32 %v296, 0.2
    %v329 = vmul.f32 %v297, 0.2
    %v330 = vmul.f32 %v298, 0.2
    %v331 = vmul.f32 %v299, 0.2
    %v332 = vmul.f32 %v300, 0.2
    %v333 = vsel %vm301, %v285, %v317
    %v334 = vsel %vm302, %v286, %v318
    %v335 = vsel %vm303, %v287, %v319
    %v336 = vsel %vm304, %v288, %v320
    %v337 = vsel %vm305, %v289, %v321
    %v338 = vsel %vm306, %v290, %v322
    %v339 = vsel %vm307, %v291, %v323
    %v340 = vsel %vm308, %v292, %v324
    %v341 = vsel %vm309, %v293, %v325
    %v342 = vsel %vm310, %v294, %v326
    %v343 = vsel %vm311, %v295, %v327
    %v344 = vsel %vm312, %v296, %v328
    %v345 = vsel %vm313, %v297, %v329
    %v346 = vsel %vm314, %v298, %v330
    %v347 = vsel %vm315, %v299, %v331
    %v348 = vsel %vm316, %v300, %v332
    %v349 = vld [vmem:[#allocation8] sm:$0x3]
    %v350 = vld [vmem:[#allocation8 + $0x2] sm:$0x3]
    %v351 = vunpack.c.0.s8 %v349
    %v352 = vunpack.c.0.s8 %v350
    %v353 = vcvt.s32.f32 %v351
    %v354 = vcvt.s32.f32 %v352
    %v355 = vsub.f32 %v353, 1.0
    %v356 = vsub.f32 %v354, 1.0
    %v357 = vmul.f32 %v355, 1e+30
    %v358 = vmul.f32 %v356, 1e+30
    %v359 = vadd.f32 %v333, %v357
    %v360 = vadd.f32 %v334, %v358
    %v361 = vadd.f32 %v335, %v357
    %v362 = vadd.f32 %v336, %v358
    %v363 = vadd.f32 %v337, %v357
    %v364 = vadd.f32 %v338, %v358
    %v365 = vadd.f32 %v339, %v357
    %v366 = vadd.f32 %v340, %v358
    %v367 = vadd.f32 %v341, %v357
    %v368 = vadd.f32 %v342, %v358
    %v369 = vadd.f32 %v343, %v357
    %v370 = vadd.f32 %v344, %v358
    %v371 = vadd.f32 %v345, %v357
    %v372 = vadd.f32 %v346, %v358
    %v373 = vadd.f32 %v347, %v357
    %v374 = vadd.f32 %v348, %v358
    %v375 = vld [vmem:[#allocation2] sm:$0x1]
    %v376 = vld [vmem:[#allocation2 + $0x1] sm:$0x1]
    %v377 = vld [vmem:[#allocation2 + $0x2] sm:$0x1]
    %v378 = vld [vmem:[#allocation2 + $0x3] sm:$0x1]
    %v379 = vld [vmem:[#allocation2 + $0x4] sm:$0x1]
    %v380 = vld [vmem:[#allocation2 + $0x5] sm:$0x1]
    %v381 = vld [vmem:[#allocation2 + $0x6] sm:$0x1]
    %v382 = vld [vmem:[#allocation2 + $0x7] sm:$0x1]
    %vm383 = vcmask 130048
    %v384 = vsel %vm383, %v359, -inf
    %v385 = vsel %vm383, %v360, -inf
    %v386 = vmax.f32 %v384, %v385
    %v387 = vrot.slane %v386, 4
    %v388 = vmax.f32 %v386, %v387
    %v389 = vrot.slane %v388, 2
    %v390 = vmax.f32 %v388, %v389
    %v391 = vrot.slane %v390, 1
    %v392 = vmax.f32 %v390, %v391
    %v393 = vsel %vm383, %v361, -inf
    %v394 = vsel %vm383, %v362, -inf
    %v395 = vmax.f32 %v393, %v394
    %v396 = vrot.slane %v395, 4
    %v397 = vmax.f32 %v395, %v396
    %v398 = vrot.slane %v397, 2
    %v399 = vmax.f32 %v397, %v398
    %v400 = vrot.slane %v399, 1
    %v401 = vmax.f32 %v399, %v400
    %v402 = vsel %vm383, %v363, -inf
    %v403 = vsel %vm383, %v364, -inf
    %v404 = vmax.f32 %v402, %v403
    %v405 = vrot.slane %v404, 4
    %v406 = vmax.f32 %v404, %v405
    %v407 = vrot.slane %v406, 2
    %v408 = vmax.f32 %v406, %v407
    %v409 = vrot.slane %v408, 1
    %v410 = vmax.f32 %v408, %v409
    %v411 = vsel %vm383, %v365, -inf
    %v412 = vsel %vm383, %v366, -inf
    %v413 = vmax.f32 %v411, %v412
    %v414 = vrot.slane %v413, 4
    %v415 = vmax.f32 %v413, %v414
    %v416 = vrot.slane %v415, 2
    %v417 = vmax.f32 %v415, %v416
    %v418 = vrot.slane %v417, 1
    %v419 = vmax.f32 %v417, %v418
    %v420 = vsel %vm383, %v367, -inf
    %v421 = vsel %vm383, %v368, -inf
    %v422 = vmax.f32 %v420, %v421
    %v423 = vrot.slane %v422, 4
    %v424 = vmax.f32 %v422, %v423
    %v425 = vrot.slane %v424, 2
    %v426 = vmax.f32 %v424, %v425
    %v427 = vrot.slane %v426, 1
    %v428 = vmax.f32 %v426, %v427
    %v429 = vsel %vm383, %v369, -inf
    %v430 = vsel %vm383, %v370, -inf
    %v431 = vmax.f32 %v429, %v430
    %v432 = vrot.slane %v431, 4
    %v433 = vmax.f32 %v431, %v432
    %v434 = vrot.slane %v433, 2
    %v435 = vmax.f32 %v433, %v434
    %v436 = vrot.slane %v435, 1
    %v437 = vmax.f32 %v435, %v436
    %v438 = vsel %vm383, %v371, -inf
    %v439 = vsel %vm383, %v372, -inf
    %v440 = vmax.f32 %v438, %v439
    %v441 = vrot.slane %v440, 4
    %v442 = vmax.f32 %v440, %v441
    %v443 = vrot.slane %v442, 2
    %v444 = vmax.f32 %v442, %v443
    %v445 = vrot.slane %v444, 1
    %v446 = vmax.f32 %v444, %v445
    %v447 = vsel %vm383, %v373, -inf
    %v448 = vsel %vm383, %v374, -inf
    %v449 = vmax.f32 %v447, %v448
    %v450 = vrot.slane %v449, 4
    %v451 = vmax.f32 %v449, %v450
    %v452 = vrot.slane %v451, 2
    %v453 = vmax.f32 %v451, %v452
    %v454 = vrot.slane %v453, 1
    %v455 = vmax.f32 %v453, %v454
    %v456 = vmax.f32 %v375, %v392
    %v457 = vmax.f32 %v376, %v401
    %v458 = vmax.f32 %v377, %v410
    %v459 = vmax.f32 %v378, %v419
    %v460 = vmax.f32 %v379, %v428
    %v461 = vmax.f32 %v380, %v437
    %v462 = vmax.f32 %v381, %v446
    %v463 = vmax.f32 %v382, %v455
    %v464 = vsub.f32 %v375, %v456
    %v465 = vsub.f32 %v376, %v457
    %v466 = vsub.f32 %v377, %v458
    %v467 = vsub.f32 %v378, %v459
    %v468 = vsub.f32 %v379, %v460
    %v469 = vsub.f32 %v380, %v461
    %v470 = vsub.f32 %v381, %v462
    %v471 = vsub.f32 %v382, %v463
    %v472 = vmul.f32 %v464, 1.442695
    %v473 = vpow.pop %v472
    %v474 = vmul.f32 %v465, 1.442695
    %v475 = vpow.pop %v474
    %v476 = vmul.f32 %v466, 1.442695
    %v477 = vpow.pop %v476
    %v478 = vmul.f32 %v467, 1.442695
    %v479 = vpow.pop %v478
    %v480 = vmul.f32 %v468, 1.442695
    %v481 = vpow.pop %v480
    %v482 = vmul.f32 %v469, 1.442695
    %v483 = vpow.pop %v482
    %v484 = vmul.f32 %v470, 1.442695
    %v485 = vpow.pop %v484
    %v486 = vmul.f32 %v471, 1.442695
    %v487 = vpow.pop %v486
    %v496 = vlaneseq
    %v497 = vshrl.u32 %v496, 7
    %v498 = vsub.s32 0, %v497
    %v499 = vrot.slane %v456, %v498
    %v500 = vlaneseq
    %v501 = vshrl.u32 %v500, 7
    %v502 = vsub.s32 0, %v501
    %v503 = vrot.slane %v457, %v502
    %v504 = vlaneseq
    %v505 = vshrl.u32 %v504, 7
    %v506 = vsub.s32 0, %v505
    %v507 = vrot.slane %v458, %v506
    %v508 = vlaneseq
    %v509 = vshrl.u32 %v508, 7
    %v510 = vsub.s32 0, %v509
    %v511 = vrot.slane %v459, %v510
    %v512 = vlaneseq
    %v513 = vshrl.u32 %v512, 7
    %v514 = vsub.s32 0, %v513
    %v515 = vrot.slane %v460, %v514
    %v516 = vlaneseq
    %v517 = vshrl.u32 %v516, 7
    %v518 = vsub.s32 0, %v517
    %v519 = vrot.slane %v461, %v518
    %v520 = vlaneseq
    %v521 = vshrl.u32 %v520, 7
    %v522 = vsub.s32 0, %v521
    %v523 = vrot.slane %v462, %v522
    %v524 = vlaneseq
    %v525 = vshrl.u32 %v524, 7
    %v526 = vsub.s32 0, %v525
    %v527 = vrot.slane %v463, %v526
    %v536 = vsub.f32 %v359, %v499
    %v537 = vsub.f32 %v360, %v499
    %v538 = vsub.f32 %v361, %v503
    %v539 = vsub.f32 %v362, %v503
    %v540 = vsub.f32 %v363, %v507
    %v541 = vsub.f32 %v364, %v507
    %v542 = vsub.f32 %v365, %v511
    %v543 = vsub.f32 %v366, %v511
    %v544 = vsub.f32 %v367, %v515
    %v545 = vsub.f32 %v368, %v515
    %v546 = vsub.f32 %v369, %v519
    %v547 = vsub.f32 %v370, %v519
    %v548 = vsub.f32 %v371, %v523
    %v549 = vsub.f32 %v372, %v523
    %v550 = vsub.f32 %v373, %v527
    %v551 = vsub.f32 %v374, %v527
    %v552 = vmul.f32 %v536, 1.442695
    %v553 = vpow.pop %v552
    %v554 = vmul.f32 %v537, 1.442695
    %v555 = vpow.pop %v554
    %v556 = vmul.f32 %v538, 1.442695
    %v557 = vpow.pop %v556
    %v558 = vmul.f32 %v539, 1.442695
    %v559 = vpow.pop %v558
    %v560 = vmul.f32 %v540, 1.442695
    %v561 = vpow.pop %v560
    %v562 = vmul.f32 %v541, 1.442695
    %v563 = vpow.pop %v562
    %v564 = vmul.f32 %v542, 1.442695
    %v565 = vpow.pop %v564
    %v566 = vmul.f32 %v543, 1.442695
    %v567 = vpow.pop %v566
    %v568 = vmul.f32 %v544, 1.442695
    %v569 = vpow.pop %v568
    %v570 = vmul.f32 %v545, 1.442695
    %v571 = vpow.pop %v570
    %v572 = vmul.f32 %v546, 1.442695
    %v573 = vpow.pop %v572
    %v574 = vmul.f32 %v547, 1.442695
    %v575 = vpow.pop %v574
    %v576 = vmul.f32 %v548, 1.442695
    %v577 = vpow.pop %v576
    %v578 = vmul.f32 %v549, 1.442695
    %v579 = vpow.pop %v578
    %v580 = vmul.f32 %v550, 1.442695
    %v581 = vpow.pop %v580
    %v582 = vmul.f32 %v551, 1.442695
    %v583 = vpow.pop %v582
    %v584 = vld [vmem:[#allocation3] sm:$0x1]
    %v585 = vld [vmem:[#allocation3 + $0x1] sm:$0x1]
    %v586 = vld [vmem:[#allocation3 + $0x2] sm:$0x1]
    %v587 = vld [vmem:[#allocation3 + $0x3] sm:$0x1]
    %v588 = vld [vmem:[#allocation3 + $0x4] sm:$0x1]
    %v589 = vld [vmem:[#allocation3 + $0x5] sm:$0x1]
    %v590 = vld [vmem:[#allocation3 + $0x6] sm:$0x1]
    %v591 = vld [vmem:[#allocation3 + $0x7] sm:$0x1]
    %v592 = vmul.f32 %v473, %v584
    %v593 = vmul.f32 %v475, %v585
    %v594 = vmul.f32 %v477, %v586
    %v595 = vmul.f32 %v479, %v587
    %v596 = vmul.f32 %v481, %v588
    %v597 = vmul.f32 %v483, %v589
    %v598 = vmul.f32 %v485, %v590
    %v599 = vmul.f32 %v487, %v591
    %v600 = vsel %vm383, %v553, 0.0
    %v601 = vsel %vm383, %v555, 0.0
    %v602 = vadd.f32 %v600, %v601
    %v603 = vrot.slane %v602, 4
    %v604 = vadd.f32 %v602, %v603
    %v605 = vrot.slane %v604, 2
    %v606 = vadd.f32 %v604, %v605
    %v607 = vrot.slane %v606, 1
    %v608 = vadd.f32 %v606, %v607
    %v609 = vsel %vm383, %v557, 0.0
    %v610 = vsel %vm383, %v559, 0.0
    %v611 = vadd.f32 %v609, %v610
    %v612 = vrot.slane %v611, 4
    %v613 = vadd.f32 %v611, %v612
    %v614 = vrot.slane %v613, 2
    %v615 = vadd.f32 %v613, %v614
    %v616 = vrot.slane %v615, 1
    %v617 = vadd.f32 %v615, %v616
    %v618 = vsel %vm383, %v561, 0.0
    %v619 = vsel %vm383, %v563, 0.0
    %v620 = vadd.f32 %v618, %v619
    %v621 = vrot.slane %v620, 4
    %v622 = vadd.f32 %v620, %v621
    %v623 = vrot.slane %v622, 2
    %v624 = vadd.f32 %v622, %v623
    %v625 = vrot.slane %v624, 1
    %v626 = vadd.f32 %v624, %v625
    %v627 = vsel %vm383, %v565, 0.0
    %v628 = vsel %vm383, %v567, 0.0
    %v629 = vadd.f32 %v627, %v628
    %v630 = vrot.slane %v629, 4
    %v631 = vadd.f32 %v629, %v630
    %v632 = vrot.slane %v631, 2
    %v633 = vadd.f32 %v631, %v632
    %v634 = vrot.slane %v633, 1
    %v635 = vadd.f32 %v633, %v634
    %v636 = vsel %vm383, %v569, 0.0
    %v637 = vsel %vm383, %v571, 0.0
    %v638 = vadd.f32 %v636, %v637
    %v639 = vrot.slane %v638, 4
    %v640 = vadd.f32 %v638, %v639
    %v641 = vrot.slane %v640, 2
    %v642 = vadd.f32 %v640, %v641
    %v643 = vrot.slane %v642, 1
    %v644 = vadd.f32 %v642, %v643
    %v645 = vsel %vm383, %v573, 0.0
    %v646 = vsel %vm383, %v575, 0.0
    %v647 = vadd.f32 %v645, %v646
    %v648 = vrot.slane %v647, 4
    %v649 = vadd.f32 %v647, %v648
    %v650 = vrot.slane %v649, 2
    %v651 = vadd.f32 %v649, %v650
    %v652 = vrot.slane %v651, 1
    %v653 = vadd.f32 %v651, %v652
    %v654 = vsel %vm383, %v577, 0.0
    %v655 = vsel %vm383, %v579, 0.0
    %v656 = vadd.f32 %v654, %v655
    %v657 = vrot.slane %v656, 4
    %v658 = vadd.f32 %v656, %v657
    %v659 = vrot.slane %v658, 2
    %v660 = vadd.f32 %v658, %v659
    %v661 = vrot.slane %v660, 1
    %v662 = vadd.f32 %v660, %v661
    %v663 = vsel %vm383, %v581, 0.0
    %v664 = vsel %vm383, %v583, 0.0
    %v665 = vadd.f32 %v663, %v664
    %v666 = vrot.slane %v665, 4
    %v667 = vadd.f32 %v665, %v666
    %v668 = vrot.slane %v667, 2
    %v669 = vadd.f32 %v667, %v668
    %v670 = vrot.slane %v669, 1
    %v671 = vadd.f32 %v669, %v670
    %v672 = vadd.f32 %v592, %v608
    %v673 = vadd.f32 %v593, %v617
    %v674 = vadd.f32 %v594, %v626
    %v675 = vadd.f32 %v595, %v635
    %v676 = vadd.f32 %v596, %v644
    %v677 = vadd.f32 %v597, %v653
    %v678 = vadd.f32 %v598, %v662
    %v679 = vadd.f32 %v599, %v671
    %vm680 = vcmask 122880
    %681 = vst.msk [vmem:[#allocation3] sm:$0x1] %vm680, %v672
    %682 = vst.msk [vmem:[#allocation3 + $0x1] sm:$0x1] %vm680, %v673
    %683 = vst.msk [vmem:[#allocation3 + $0x2] sm:$0x1] %vm680, %v674
    %684 = vst.msk [vmem:[#allocation3 + $0x3] sm:$0x1] %vm680, %v675
    %685 = vst.msk [vmem:[#allocation3 + $0x4] sm:$0x1] %vm680, %v676
    %686 = vst.msk [vmem:[#allocation3 + $0x5] sm:$0x1] %vm680, %v677
    %687 = vst.msk [vmem:[#allocation3 + $0x6] sm:$0x1] %vm680, %v678
    %688 = vst.msk [vmem:[#allocation3 + $0x7] sm:$0x1] %vm680, %v679
    %v689 = vld [vmem:[#allocation4] sm:$0xff]
    %v690 = vld [vmem:[#allocation4 + $0x8] sm:$0xff]
    %v691 = vld [vmem:[#allocation4 + $0x10] sm:$0xff]
    %v692 = vld [vmem:[#allocation4 + $0x18] sm:$0xff]
    %v693 = vld [vmem:[#allocation4 + $0x20] sm:$0xff]
    %v694 = vld [vmem:[#allocation4 + $0x28] sm:$0xff]
    %v695 = vld [vmem:[#allocation4 + $0x30] sm:$0xff]
    %v696 = vld [vmem:[#allocation4 + $0x38] sm:$0xff]
    %v697 = vld [vmem:[#allocation4 + $0x40] sm:$0xff]
    %v698 = vld [vmem:[#allocation4 + $0x48] sm:$0xff]
    %v699 = vld [vmem:[#allocation4 + $0x50] sm:$0xff]
    %v700 = vld [vmem:[#allocation4 + $0x58] sm:$0xff]
    %v701 = vld [vmem:[#allocation4 + $0x60] sm:$0xff]
    %v702 = vld [vmem:[#allocation4 + $0x68] sm:$0xff]
    %v703 = vld [vmem:[#allocation4 + $0x70] sm:$0xff]
    %v704 = vld [vmem:[#allocation4 + $0x78] sm:$0xff]
    %v713 = vlaneseq
    %v714 = vshrl.u32 %v713, 7
    %v715 = vsub.s32 0, %v714
    %v716 = vrot.slane %v473, %v715
    %v717 = vlaneseq
    %v718 = vshrl.u32 %v717, 7
    %v719 = vsub.s32 0, %v718
    %v720 = vrot.slane %v475, %v719
    %v721 = vlaneseq
    %v722 = vshrl.u32 %v721, 7
    %v723 = vsub.s32 0, %v722
    %v724 = vrot.slane %v477, %v723
    %v725 = vlaneseq
    %v726 = vshrl.u32 %v725, 7
    %v727 = vsub.s32 0, %v726
    %v728 = vrot.slane %v479, %v727
    %v729 = vlaneseq
    %v730 = vshrl.u32 %v729, 7
    %v731 = vsub.s32 0, %v730
    %v732 = vrot.slane %v481, %v731
    %v733 = vlaneseq
    %v734 = vshrl.u32 %v733, 7
    %v735 = vsub.s32 0, %v734
    %v736 = vrot.slane %v483, %v735
    %v737 = vlaneseq
    %v738 = vshrl.u32 %v737, 7
    %v739 = vsub.s32 0, %v738
    %v740 = vrot.slane %v485, %v739
    %v741 = vlaneseq
    %v742 = vshrl.u32 %v741, 7
    %v743 = vsub.s32 0, %v742
    %v744 = vrot.slane %v487, %v743
    %v753 = vmul.f32 %v716, %v689
    %v754 = vmul.f32 %v716, %v690
    %v755 = vmul.f32 %v720, %v691
    %v756 = vmul.f32 %v720, %v692
    %v757 = vmul.f32 %v724, %v693
    %v758 = vmul.f32 %v724, %v694
    %v759 = vmul.f32 %v728, %v695
    %v760 = vmul.f32 %v728, %v696
    %v761 = vmul.f32 %v732, %v697
    %v762 = vmul.f32 %v732, %v698
    %v763 = vmul.f32 %v736, %v699
    %v764 = vmul.f32 %v736, %v700
    %v765 = vmul.f32 %v740, %v701
    %v766 = vmul.f32 %v740, %v702
    %v767 = vmul.f32 %v744, %v703
    %v768 = vmul.f32 %v744, %v704
    %v769 = vld [vmem:[#allocation10] sm:$0xf]
    %v770 = vld [vmem:[#allocation10 + $0x4] sm:$0xf]
    %v771 = vld [vmem:[#allocation10 + $0x8] sm:$0xf]
    %v772 = vld [vmem:[#allocation10 + $0xc] sm:$0xf]
    %v773 = vld [vmem:[#allocation10 + $0x10] sm:$0xf]
    %v774 = vld [vmem:[#allocation10 + $0x14] sm:$0xf]
    %v775 = vld [vmem:[#allocation10 + $0x18] sm:$0xf]
    %v776 = vld [vmem:[#allocation10 + $0x1c] sm:$0xf]
    %v777 = vld [vmem:[#allocation10 + $0x20] sm:$0xf]
    %v778 = vld [vmem:[#allocation10 + $0x24] sm:$0xf]
    %v779 = vld [vmem:[#allocation10 + $0x28] sm:$0xf]
    %v780 = vld [vmem:[#allocation10 + $0x2c] sm:$0xf]
    %v781 = vld [vmem:[#allocation10 + $0x30] sm:$0xf]
    %v782 = vld [vmem:[#allocation10 + $0x34] sm:$0xf]
    %v783 = vld [vmem:[#allocation10 + $0x38] sm:$0xf]
    %v784 = vld [vmem:[#allocation10 + $0x3c] sm:$0xf]
    %v785 = vpack.c.bf16 %v555, %v553
    %v786 = vpack.c.bf16 %v559, %v557
    %v787 = vpack.c.bf16 %v563, %v561
    %v788 = vpack.c.bf16 %v567, %v565
    %v789 = vpack.c.bf16 %v571, %v569
    %v790 = vpack.c.bf16 %v575, %v573
    %v791 = vpack.c.bf16 %v579, %v577
    %v792 = vpack.c.bf16 %v583, %v581
    %v795 = vunpack.c.l.b16 %v769
    %v796 = vunpack.c.l.b16 %v770
    %v797 = vpack.c.b16 %v796, %v795
    %v799 = vsel %vm383, %v797, 0
    %801 = vmatprep.subr.bf16.mxu0 0
    %802 = vmatpush1.bf16.msra.mxu0 %v785
    %803 = vmatprep.subr.bf16.mxu0 0
    %804 = vmatpush1.bf16.msra.mxu0 0
    %805 = vmatprep.subr.bf16.mxu0 0
    %806 = vmatpush1.bf16.msra.mxu0 0
    %807 = vmatprep.subr.bf16.mxu0 0
    %808 = vmatpush1.bf16.msra.mxu0 0
    %809 = vmatprep.subr.bf16.mxu0 0
    %810 = vmatpush1.bf16.msra.mxu0 0
    %811 = vmatprep.subr.bf16.mxu0 0
    %812 = vmatpush1.bf16.msra.mxu0 0
    %813 = vmatprep.subr.bf16.mxu0 0
    %814 = vmatpush1.bf16.msra.mxu0 0
    %815 = vmatprep.subr.bf16.mxu0 0
    %816 = vmatpush1.bf16.msra.mxu0 0
    %817 = vmatprep.subr.bf16.mxu0 0
    %818 = vmatpush1.bf16.msra.mxu0 0
    %819 = vmatprep.subr.bf16.mxu0 0
    %820 = vmatpush1.bf16.msra.mxu0 0
    %821 = vmatprep.subr.bf16.mxu0 0
    %822 = vmatpush1.bf16.msra.mxu0 0
    %823 = vmatprep.subr.bf16.mxu0 0
    %824 = vmatpush1.bf16.msra.mxu0 0
    %825 = vmatprep.subr.bf16.mxu0 0
    %826 = vmatpush1.bf16.msra.mxu0 0
    %827 = vmatprep.subr.bf16.mxu0 0
    %828 = vmatpush1.bf16.msra.mxu0 0
    %829 = vmatprep.subr.bf16.mxu0 0
    %830 = vmatpush1.bf16.msra.mxu0 0
    %831 = vmatprep.subr.bf16.mxu0 0
    %832 = vmatpush1.bf16.msra.mxu0 0
    %833 = vmatprep.mubr.bf16.mxu0 0
    %834 = vmatmul.mubr.bf16.gmra.mrb[0].mxu0 %v799
    %v835 = vpop.f32.mrb[0].mxu0
    %v836 = vadd.f32 0.0, %v835
    %v837 = vpop.f32.mrb[0].mxu0
    %v838 = vpop.f32.mrb[0].mxu0
    %v839 = vadd.f32 0.0, %v838
    %v840 = vpop.f32.mrb[0].mxu0
    %841 = vdwg.mxu0
    %v844 = vunpack.c.l.b16 %v771
    %v845 = vunpack.c.l.b16 %v772
    %v846 = vpack.c.b16 %v845, %v844
    %v848 = vsel %vm383, %v846, 0
    %850 = vmatprep.subr.bf16.mxu0 0
    %851 = vmatpush1.bf16.msra.mxu0 %v786
    %852 = vmatprep.subr.bf16.mxu0 0
    %853 = vmatpush1.bf16.msra.mxu0 0
    %854 = vmatprep.subr.bf16.mxu0 0
    %855 = vmatpush1.bf16.msra.mxu0 0
    %856 = vmatprep.subr.bf16.mxu0 0
    %857 = vmatpush1.bf16.msra.mxu0 0
    %858 = vmatprep.subr.bf16.mxu0 0
    %859 = vmatpush1.bf16.msra.mxu0 0
    %860 = vmatprep.subr.bf16.mxu0 0
    %861 = vmatpush1.bf16.msra.mxu0 0
    %862 = vmatprep.subr.bf16.mxu0 0
    %863 = vmatpush1.bf16.msra.mxu0 0
    %864 = vmatprep.subr.bf16.mxu0 0
    %865 = vmatpush1.bf16.msra.mxu0 0
    %866 = vmatprep.subr.bf16.mxu0 0
    %867 = vmatpush1.bf16.msra.mxu0 0
    %868 = vmatprep.subr.bf16.mxu0 0
    %869 = vmatpush1.bf16.msra.mxu0 0
    %870 = vmatprep.subr.bf16.mxu0 0
    %871 = vmatpush1.bf16.msra.mxu0 0
    %872 = vmatprep.subr.bf16.mxu0 0
    %873 = vmatpush1.bf16.msra.mxu0 0
    %874 = vmatprep.subr.bf16.mxu0 0
    %875 = vmatpush1.bf16.msra.mxu0 0
    %876 = vmatprep.subr.bf16.mxu0 0
    %877 = vmatpush1.bf16.msra.mxu0 0
    %878 = vmatprep.subr.bf16.mxu0 0
    %879 = vmatpush1.bf16.msra.mxu0 0
    %880 = vmatprep.subr.bf16.mxu0 0
    %881 = vmatpush1.bf16.msra.mxu0 0
    %882 = vmatprep.mubr.bf16.mxu0 0
    %883 = vmatmul.mubr.bf16.gmra.mrb[0].mxu0 %v848
    %v884 = vpop.f32.mrb[0].mxu0
    %v885 = vadd.f32 0.0, %v884
    %v886 = vpop.f32.mrb[0].mxu0
    %v887 = vpop.f32.mrb[0].mxu0
    %v888 = vadd.f32 0.0, %v887
    %v889 = vpop.f32.mrb[0].mxu0
    %890 = vdwg.mxu0
    %v893 = vunpack.c.l.b16 %v773
    %v894 = vunpack.c.l.b16 %v774
    %v895 = vpack.c.b16 %v894, %v893
    %v897 = vsel %vm383, %v895, 0
    %899 = vmatprep.subr.bf16.mxu0 0
    %900 = vmatpush1.bf16.msra.mxu0 %v787
    %901 = vmatprep.subr.bf16.mxu0 0
    %902 = vmatpush1.bf16.msra.mxu0 0
    %903 = vmatprep.subr.bf16.mxu0 0
    %904 = vmatpush1.bf16.msra.mxu0 0
    %905 = vmatprep.subr.bf16.mxu0 0
    %906 = vmatpush1.bf16.msra.mxu0 0
    %907 = vmatprep.subr.bf16.mxu0 0
    %908 = vmatpush1.bf16.msra.mxu0 0
    %909 = vmatprep.subr.bf16.mxu0 0
    %910 = vmatpush1.bf16.msra.mxu0 0
    %911 = vmatprep.subr.bf16.mxu0 0
    %912 = vmatpush1.bf16.msra.mxu0 0
    %913 = vmatprep.subr.bf16.mxu0 0
    %914 = vmatpush1.bf16.msra.mxu0 0
    %915 = vmatprep.subr.bf16.mxu0 0
    %916 = vmatpush1.bf16.msra.mxu0 0
    %917 = vmatprep.subr.bf16.mxu0 0
    %918 = vmatpush1.bf16.msra.mxu0 0
    %919 = vmatprep.subr.bf16.mxu0 0
    %920 = vmatpush1.bf16.msra.mxu0 0
    %921 = vmatprep.subr.bf16.mxu0 0
    %922 = vmatpush1.bf16.msra.mxu0 0
    %923 = vmatprep.subr.bf16.mxu0 0
    %924 = vmatpush1.bf16.msra.mxu0 0
    %925 = vmatprep.subr.bf16.mxu0 0
    %926 = vmatpush1.bf16.msra.mxu0 0
    %927 = vmatprep.subr.bf16.mxu0 0
    %928 = vmatpush1.bf16.msra.mxu0 0
    %929 = vmatprep.subr.bf16.mxu0 0
    %930 = vmatpush1.bf16.msra.mxu0 0
    %931 = vmatprep.mubr.bf16.mxu0 0
    %932 = vmatmul.mubr.bf16.gmra.mrb[0].mxu0 %v897
    %v933 = vpop.f32.mrb[0].mxu0
    %v934 = vadd.f32 0.0, %v933
    %v935 = vpop.f32.mrb[0].mxu0
    %v936 = vpop.f32.mrb[0].mxu0
    %v937 = vadd.f32 0.0, %v936
    %v938 = vpop.f32.mrb[0].mxu0
    %939 = vdwg.mxu0
    %v942 = vunpack.c.l.b16 %v775
    %v943 = vunpack.c.l.b16 %v776
    %v944 = vpack.c.b16 %v943, %v942
    %v946 = vsel %vm383, %v944, 0
    %948 = vmatprep.subr.bf16.mxu0 0
    %949 = vmatpush1.bf16.msra.mxu0 %v788
    %950 = vmatprep.subr.bf16.mxu0 0
    %951 = vmatpush1.bf16.msra.mxu0 0
    %952 = vmatprep.subr.bf16.mxu0 0
    %953 = vmatpush1.bf16.msra.mxu0 0
    %954 = vmatprep.subr.bf16.mxu0 0
    %955 = vmatpush1.bf16.msra.mxu0 0
    %956 = vmatprep.subr.bf16.mxu0 0
    %957 = vmatpush1.bf16.msra.mxu0 0
    %958 = vmatprep.subr.bf16.mxu0 0
    %959 = vmatpush1.bf16.msra.mxu0 0
    %960 = vmatprep.subr.bf16.mxu0 0
    %961 = vmatpush1.bf16.msra.mxu0 0
    %962 = vmatprep.subr.bf16.mxu0 0
    %963 = vmatpush1.bf16.msra.mxu0 0
    %964 = vmatprep.subr.bf16.mxu0 0
    %965 = vmatpush1.bf16.msra.mxu0 0
    %966 = vmatprep.subr.bf16.mxu0 0
    %967 = vmatpush1.bf16.msra.mxu0 0
    %968 = vmatprep.subr.bf16.mxu0 0
    %969 = vmatpush1.bf16.msra.mxu0 0
    %970 = vmatprep.subr.bf16.mxu0 0
    %971 = vmatpush1.bf16.msra.mxu0 0
    %972 = vmatprep.subr.bf16.mxu0 0
    %973 = vmatpush1.bf16.msra.mxu0 0
    %974 = vmatprep.subr.bf16.mxu0 0
    %975 = vmatpush1.bf16.msra.mxu0 0
    %976 = vmatprep.subr.bf16.mxu0 0
    %977 = vmatpush1.bf16.msra.mxu0 0
    %978 = vmatprep.subr.bf16.mxu0 0
    %979 = vmatpush1.bf16.msra.mxu0 0
    %980 = vmatprep.mubr.bf16.mxu0 0
    %981 = vmatmul.mubr.bf16.gmra.mrb[0].mxu0 %v946
    %v982 = vpop.f32.mrb[0].mxu0
    %v983 = vadd.f32 0.0, %v982
    %v984 = vpop.f32.mrb[0].mxu0
    %v985 = vpop.f32.mrb[0].mxu0
    %v986 = vadd.f32 0.0, %v985
    %v987 = vpop.f32.mrb[0].mxu0
    %988 = vdwg.mxu0
    %v991 = vunpack.c.l.b16 %v777
    %v992 = vunpack.c.l.b16 %v778
    %v993 = vpack.c.b16 %v992, %v991
    %v995 = vsel %vm383, %v993, 0
    %997 = vmatprep.subr.bf16.mxu0 0
    %998 = vmatpush1.bf16.msra.mxu0 %v789
    %999 = vmatprep.subr.bf16.mxu0 0
    %1000 = vmatpush1.bf16.msra.mxu0 0
    %1001 = vmatprep.subr.bf16.mxu0 0
    %1002 = vmatpush1.bf16.msra.mxu0 0
    %1003 = vmatprep.subr.bf16.mxu0 0
    %1004 = vmatpush1.bf16.msra.mxu0 0
    %1005 = vmatprep.subr.bf16.mxu0 0
    %1006 = vmatpush1.bf16.msra.mxu0 0
    %1007 = vmatprep.subr.bf16.mxu0 0
    %1008 = vmatpush1.bf16.msra.mxu0 0
    %1009 = vmatprep.subr.bf16.mxu0 0
    %1010 = vmatpush1.bf16.msra.mxu0 0
    %1011 = vmatprep.subr.bf16.mxu0 0
    %1012 = vmatpush1.bf16.msra.mxu0 0
    %1013 = vmatprep.subr.bf16.mxu0 0
    %1014 = vmatpush1.bf16.msra.mxu0 0
    %1015 = vmatprep.subr.bf16.mxu0 0
    %1016 = vmatpush1.bf16.msra.mxu0 0
    %1017 = vmatprep.subr.bf16.mxu0 0
    %1018 = vmatpush1.bf16.msra.mxu0 0
    %1019 = vmatprep.subr.bf16.mxu0 0
    %1020 = vmatpush1.bf16.msra.mxu0 0
    %1021 = vmatprep.subr.bf16.mxu0 0
    %1022 = vmatpush1.bf16.msra.mxu0 0
    %1023 = vmatprep.subr.bf16.mxu0 0
    %1024 = vmatpush1.bf16.msra.mxu0 0
    %1025 = vmatprep.subr.bf16.mxu0 0
    %1026 = vmatpush1.bf16.msra.mxu0 0
    %1027 = vmatprep.subr.bf16.mxu0 0
    %1028 = vmatpush1.bf16.msra.mxu0 0
    %1029 = vmatprep.mubr.bf16.mxu0 0
    %1030 = vmatmul.mubr.bf16.gmra.mrb[0].mxu0 %v995
    %v1031 = vpop.f32.mrb[0].mxu0
    %v1032 = vadd.f32 0.0, %v1031
    %v1033 = vpop.f32.mrb[0].mxu0
    %v1034 = vpop.f32.mrb[0].mxu0
    %v1035 = vadd.f32 0.0, %v1034
    %v1036 = vpop.f32.mrb[0].mxu0
    %1037 = vdwg.mxu0
    %v1040 = vunpack.c.l.b16 %v779
    %v1041 = vunpack.c.l.b16 %v780
    %v1042 = vpack.c.b16 %v1041, %v1040
    %v1044 = vsel %vm383, %v1042, 0
    %1046 = vmatprep.subr.bf16.mxu0 0
    %1047 = vmatpush1.bf16.msra.mxu0 %v790
    %1048 = vmatprep.subr.bf16.mxu0 0
    %1049 = vmatpush1.bf16.msra.mxu0 0
    %1050 = vmatprep.subr.bf16.mxu0 0
    %1051 = vmatpush1.bf16.msra.mxu0 0
    %1052 = vmatprep.subr.bf16.mxu0 0
    %1053 = vmatpush1.bf16.msra.mxu0 0
    %1054 = vmatprep.subr.bf16.mxu0 0
    %1055 = vmatpush1.bf16.msra.mxu0 0
    %1056 = vmatprep.subr.bf16.mxu0 0
    %1057 = vmatpush1.bf16.msra.mxu0 0
    %1058 = vmatprep.subr.bf16.mxu0 0
    %1059 = vmatpush1.bf16.msra.mxu0 0
    %1060 = vmatprep.subr.bf16.mxu0 0
    %1061 = vmatpush1.bf16.msra.mxu0 0
    %1062 = vmatprep.subr.bf16.mxu0 0
    %1063 = vmatpush1.bf16.msra.mxu0 0
    %1064 = vmatprep.subr.bf16.mxu0 0
    %1065 = vmatpush1.bf16.msra.mxu0 0
    %1066 = vmatprep.subr.bf16.mxu0 0
    %1067 = vmatpush1.bf16.msra.mxu0 0
    %1068 = vmatprep.subr.bf16.mxu0 0
    %1069 = vmatpush1.bf16.msra.mxu0 0
    %1070 = vmatprep.subr.bf16.mxu0 0
    %1071 = vmatpush1.bf16.msra.mxu0 0
    %1072 = vmatprep.subr.bf16.mxu0 0
    %1073 = vmatpush1.bf16.msra.mxu0 0
    %1074 = vmatprep.subr.bf16.mxu0 0
    %1075 = vmatpush1.bf16.msra.mxu0 0
    %1076 = vmatprep.subr.bf16.mxu0 0
    %1077 = vmatpush1.bf16.msra.mxu0 0
    %1078 = vmatprep.mubr.bf16.mxu0 0
    %1079 = vmatmul.mubr.bf16.gmra.mrb[0].mxu0 %v1044
    %v1080 = vpop.f32.mrb[0].mxu0
    %v1081 = vadd.f32 0.0, %v1080
    %v1082 = vpop.f32.mrb[0].mxu0
    %v1083 = vpop.f32.mrb[0].mxu0
    %v1084 = vadd.f32 0.0, %v1083
    %v1085 = vpop.f32.mrb[0].mxu0
    %1086 = vdwg.mxu0
    %v1089 = vunpack.c.l.b16 %v781
    %v1090 = vunpack.c.l.b16 %v782
    %v1091 = vpack.c.b16 %v1090, %v1089
    %v1093 = vsel %vm383, %v1091, 0
    %1095 = vmatprep.subr.bf16.mxu0 0
    %1096 = vmatpush1.bf16.msra.mxu0 %v791
    %1097 = vmatprep.subr.bf16.mxu0 0
    %1098 = vmatpush1.bf16.msra.mxu0 0
    %1099 = vmatprep.subr.bf16.mxu0 0
    %1100 = vmatpush1.bf16.msra.mxu0 0
    %1101 = vmatprep.subr.bf16.mxu0 0
    %1102 = vmatpush1.bf16.msra.mxu0 0
    %1103 = vmatprep.subr.bf16.mxu0 0
    %1104 = vmatpush1.bf16.msra.mxu0 0
    %1105 = vmatprep.subr.bf16.mxu0 0
    %1106 = vmatpush1.bf16.msra.mxu0 0
    %1107 = vmatprep.subr.bf16.mxu0 0
    %1108 = vmatpush1.bf16.msra.mxu0 0
    %1109 = vmatprep.subr.bf16.mxu0 0
    %1110 = vmatpush1.bf16.msra.mxu0 0
    %1111 = vmatprep.subr.bf16.mxu0 0
    %1112 = vmatpush1.bf16.msra.mxu0 0
    %1113 = vmatprep.subr.bf16.mxu0 0
    %1114 = vmatpush1.bf16.msra.mxu0 0
    %1115 = vmatprep.subr.bf16.mxu0 0
    %1116 = vmatpush1.bf16.msra.mxu0 0
    %1117 = vmatprep.subr.bf16.mxu0 0
    %1118 = vmatpush1.bf16.msra.mxu0 0
    %1119 = vmatprep.subr.bf16.mxu0 0
    %1120 = vmatpush1.bf16.msra.mxu0 0
    %1121 = vmatprep.subr.bf16.mxu0 0
    %1122 = vmatpush1.bf16.msra.mxu0 0
    %1123 = vmatprep.subr.bf16.mxu0 0
    %1124 = vmatpush1.bf16.msra.mxu0 0
    %1125 = vmatprep.subr.bf16.mxu0 0
    %1126 = vmatpush1.bf16.msra.mxu0 0
    %1127 = vmatprep.mubr.bf16.mxu0 0
    %1128 = vmatmul.mubr.bf16.gmra.mrb[0].mxu0 %v1093
    %v1129 = vpop.f32.mrb[0].mxu0
    %v1130 = vadd.f32 0.0, %v1129
    %v1131 = vpop.f32.mrb[0].mxu0
    %v1132 = vpop.f32.mrb[0].mxu0
    %v1133 = vadd.f32 0.0, %v1132
    %v1134 = vpop.f32.mrb[0].mxu0
    %1135 = vdwg.mxu0
    %v1138 = vunpack.c.l.b16 %v783
    %v1139 = vunpack.c.l.b16 %v784
    %v1140 = vpack.c.b16 %v1139, %v1138
    %v1142 = vsel %vm383, %v1140, 0
    %1144 = vmatprep.subr.bf16.mxu0 0
    %1145 = vmatpush1.bf16.msra.mxu0 %v792
    %1146 = vmatprep.subr.bf16.mxu0 0
    %1147 = vmatpush1.bf16.msra.mxu0 0
    %1148 = vmatprep.subr.bf16.mxu0 0
    %1149 = vmatpush1.bf16.msra.mxu0 0
    %1150 = vmatprep.subr.bf16.mxu0 0
    %1151 = vmatpush1.bf16.msra.mxu0 0
    %1152 = vmatprep.subr.bf16.mxu0 0
    %1153 = vmatpush1.bf16.msra.mxu0 0
    %1154 = vmatprep.subr.bf16.mxu0 0
    %1155 = vmatpush1.bf16.msra.mxu0 0
    %1156 = vmatprep.subr.bf16.mxu0 0
    %1157 = vmatpush1.bf16.msra.mxu0 0
    %1158 = vmatprep.subr.bf16.mxu0 0
    %1159 = vmatpush1.bf16.msra.mxu0 0
    %1160 = vmatprep.subr.bf16.mxu0 0
    %1161 = vmatpush1.bf16.msra.mxu0 0
    %1162 = vmatprep.subr.bf16.mxu0 0
    %1163 = vmatpush1.bf16.msra.mxu0 0
    %1164 = vmatprep.subr.bf16.mxu0 0
    %1165 = vmatpush1.bf16.msra.mxu0 0
    %1166 = vmatprep.subr.bf16.mxu0 0
    %1167 = vmatpush1.bf16.msra.mxu0 0
    %1168 = vmatprep.subr.bf16.mxu0 0
    %1169 = vmatpush1.bf16.msra.mxu0 0
    %1170 = vmatprep.subr.bf16.mxu0 0
    %1171 = vmatpush1.bf16.msra.mxu0 0
    %1172 = vmatprep.subr.bf16.mxu0 0
    %1173 = vmatpush1.bf16.msra.mxu0 0
    %1174 = vmatprep.subr.bf16.mxu0 0
    %1175 = vmatpush1.bf16.msra.mxu0 0
    %1176 = vmatprep.mubr.bf16.mxu0 0
    %1177 = vmatmul.mubr.bf16.gmra.mrb[0].mxu0 %v1142
    %v1178 = vpop.f32.mrb[0].mxu0
    %v1179 = vadd.f32 0.0, %v1178
    %v1180 = vpop.f32.mrb[0].mxu0
    %v1181 = vpop.f32.mrb[0].mxu0
    %v1182 = vadd.f32 0.0, %v1181
    %v1183 = vpop.f32.mrb[0].mxu0
    %1184 = vdwg.mxu0
    %v1185 = vadd.f32 %v753, %v836
    %v1186 = vadd.f32 %v754, %v839
    %v1187 = vadd.f32 %v755, %v885
    %v1188 = vadd.f32 %v756, %v888
    %v1189 = vadd.f32 %v757, %v934
    %v1190 = vadd.f32 %v758, %v937
    %v1191 = vadd.f32 %v759, %v983
    %v1192 = vadd.f32 %v760, %v986
    %v1193 = vadd.f32 %v761, %v1032
    %v1194 = vadd.f32 %v762, %v1035
    %v1195 = vadd.f32 %v763, %v1081
    %v1196 = vadd.f32 %v764, %v1084
    %v1197 = vadd.f32 %v765, %v1130
    %v1198 = vadd.f32 %v766, %v1133
    %v1199 = vadd.f32 %v767, %v1179
    %v1200 = vadd.f32 %v768, %v1182
    %1201 = vst.msk [vmem:[#allocation4] sm:$0xff] %vm383, %v1185
    %1202 = vst.msk [vmem:[#allocation4 + $0x8] sm:$0xff] %vm383, %v1186
    %1203 = vst.msk [vmem:[#allocation4 + $0x10] sm:$0xff] %vm383, %v1187
    %1204 = vst.msk [vmem:[#allocation4 + $0x18] sm:$0xff] %vm383, %v1188
    %1205 = vst.msk [vmem:[#allocation4 + $0x20] sm:$0xff] %vm383, %v1189
    %1206 = vst.msk [vmem:[#allocation4 + $0x28] sm:$0xff] %vm383, %v1190
    %1207 = vst.msk [vmem:[#allocation4 + $0x30] sm:$0xff] %vm383, %v1191
    %1208 = vst.msk [vmem:[#allocation4 + $0x38] sm:$0xff] %vm383, %v1192
    %1209 = vst.msk [vmem:[#allocation4 + $0x40] sm:$0xff] %vm383, %v1193
    %1210 = vst.msk [vmem:[#allocation4 + $0x48] sm:$0xff] %vm383, %v1194
    %1211 = vst.msk [vmem:[#allocation4 + $0x50] sm:$0xff] %vm383, %v1195
    %1212 = vst.msk [vmem:[#allocation4 + $0x58] sm:$0xff] %vm383, %v1196
    %1213 = vst.msk [vmem:[#allocation4 + $0x60] sm:$0xff] %vm383, %v1197
    %1214 = vst.msk [vmem:[#allocation4 + $0x68] sm:$0xff] %vm383, %v1198
    %1215 = vst.msk [vmem:[#allocation4 + $0x70] sm:$0xff] %vm383, %v1199
    %1216 = vst.msk [vmem:[#allocation4 + $0x78] sm:$0xff] %vm383, %v1200
    %1217 = vst.msk [vmem:[#allocation2] sm:$0x1] %vm680, %v456
    %1218 = vst.msk [vmem:[#allocation2 + $0x1] sm:$0x1] %vm680, %v457
    %1219 = vst.msk [vmem:[#allocation2 + $0x2] sm:$0x1] %vm680, %v458
    %1220 = vst.msk [vmem:[#allocation2 + $0x3] sm:$0x1] %vm680, %v459
    %1221 = vst.msk [vmem:[#allocation2 + $0x4] sm:$0x1] %vm680, %v460
    %1222 = vst.msk [vmem:[#allocation2 + $0x5] sm:$0x1] %vm680, %v461
    %1223 = vst.msk [vmem:[#allocation2 + $0x6] sm:$0x1] %vm680, %v462
    %1224 = vst.msk [vmem:[#allocation2 + $0x7] sm:$0x1] %vm680, %v463
    // Predicated region
    $region46: #{tpu_custom_call.1} parent=1 // pred_check
      %p1225 = pneg %p67
    $region47: #{tpu_custom_call.1} parent=1 // pred_check_branch
      %1227 = sbr.rel (%p1225) target = $region49
    $region48: #{tpu_custom_call.1} parent=1 // pred_region
      %v1228 = vld [vmem:[#allocation3] sm:$0x1]
      %v1229 = vld [vmem:[#allocation3 + $0x1] sm:$0x1]
      %v1230 = vld [vmem:[#allocation3 + $0x2] sm:$0x1]
      %v1231 = vld [vmem:[#allocation3 + $0x3] sm:$0x1]
      %v1232 = vld [vmem:[#allocation3 + $0x4] sm:$0x1]
      %v1233 = vld [vmem:[#allocation3 + $0x5] sm:$0x1]
      %v1234 = vld [vmem:[#allocation3 + $0x6] sm:$0x1]
      %v1235 = vld [vmem:[#allocation3 + $0x7] sm:$0x1]
      %v1236 = vrcp.pop %v1228
      %v1237 = vrcp.pop %v1229
      %v1238 = vrcp.pop %v1230
      %v1239 = vrcp.pop %v1231
      %v1240 = vrcp.pop %v1232
      %v1241 = vrcp.pop %v1233
      %v1242 = vrcp.pop %v1234
      %v1243 = vrcp.pop %v1235
      %v1244 = vld [vmem:[#allocation4] sm:$0xff]
      %v1245 = vld [vmem:[#allocation4 + $0x8] sm:$0xff]
      %v1246 = vld [vmem:[#allocation4 + $0x10] sm:$0xff]
      %v1247 = vld [vmem:[#allocation4 + $0x18] sm:$0xff]
      %v1248 = vld [vmem:[#allocation4 + $0x20] sm:$0xff]
      %v1249 = vld [vmem:[#allocation4 + $0x28] sm:$0xff]
      %v1250 = vld [vmem:[#allocation4 + $0x30] sm:$0xff]
      %v1251 = vld [vmem:[#allocation4 + $0x38] sm:$0xff]
      %v1252 = vld [vmem:[#allocation4 + $0x40] sm:$0xff]
      %v1253 = vld [vmem:[#allocation4 + $0x48] sm:$0xff]
      %v1254 = vld [vmem:[#allocation4 + $0x50] sm:$0xff]
      %v1255 = vld [vmem:[#allocation4 + $0x58] sm:$0xff]
      %v1256 = vld [vmem:[#allocation4 + $0x60] sm:$0xff]
      %v1257 = vld [vmem:[#allocation4 + $0x68] sm:$0xff]
      %v1258 = vld [vmem:[#allocation4 + $0x70] sm:$0xff]
      %v1259 = vld [vmem:[#allocation4 + $0x78] sm:$0xff]
      %v1268 = vlaneseq
      %v1269 = vshrl.u32 %v1268, 7
      %v1270 = vsub.s32 0, %v1269
      %v1271 = vrot.slane %v1236, %v1270
      %v1272 = vlaneseq
      %v1273 = vshrl.u32 %v1272, 7
      %v1274 = vsub.s32 0, %v1273
      %v1275 = vrot.slane %v1237, %v1274
      %v1276 = vlaneseq
      %v1277 = vshrl.u32 %v1276, 7
      %v1278 = vsub.s32 0, %v1277
      %v1279 = vrot.slane %v1238, %v1278
      %v1280 = vlaneseq
      %v1281 = vshrl.u32 %v1280, 7
      %v1282 = vsub.s32 0, %v1281
      %v1283 = vrot.slane %v1239, %v1282
      %v1284 = vlaneseq
      %v1285 = vshrl.u32 %v1284, 7
      %v1286 = vsub.s32 0, %v1285
      %v1287 = vrot.slane %v1240, %v1286
      %v1288 = vlaneseq
      %v1289 = vshrl.u32 %v1288, 7
      %v1290 = vsub.s32 0, %v1289
      %v1291 = vrot.slane %v1241, %v1290
      %v1292 = vlaneseq
      %v1293 = vshrl.u32 %v1292, 7
      %v1294 = vsub.s32 0, %v1293
      %v1295 = vrot.slane %v1242, %v1294
      %v1296 = vlaneseq
      %v1297 = vshrl.u32 %v1296, 7
      %v1298 = vsub.s32 0, %v1297
      %v1299 = vrot.slane %v1243, %v1298
      %v1308 = vmul.f32 %v1244, %v1271
      %v1309 = vmul.f32 %v1245, %v1271
      %v1310 = vmul.f32 %v1246, %v1275
      %v1311 = vmul.f32 %v1247, %v1275
      %v1312 = vmul.f32 %v1248, %v1279
      %v1313 = vmul.f32 %v1249, %v1279
      %v1314 = vmul.f32 %v1250, %v1283
      %v1315 = vmul.f32 %v1251, %v1283
      %v1316 = vmul.f32 %v1252, %v1287
      %v1317 = vmul.f32 %v1253, %v1287
      %v1318 = vmul.f32 %v1254, %v1291
      %v1319 = vmul.f32 %v1255, %v1291
      %v1320 = vmul.f32 %v1256, %v1295
      %v1321 = vmul.f32 %v1257, %v1295
      %v1322 = vmul.f32 %v1258, %v1299
      %v1323 = vmul.f32 %v1259, %v1299
      %v1324 = vld [vmem:[%s5] sm:$0xff]
      %v1325 = vlaneseq
      %v1326 = vshrl.u32 %v1325, 7
      %v1327 = vsub.s32 0, %v1326
      %v1328 = vrot.slane %v1324, %v1327
      %1330 = vbcast.lane.b32.xlu0 %v1328, 256
      %v1331 = vpop.permute.xlu0 %1330
      %s1333 = sor.u32 256, 8
      %1334 = vbcast.lane.b32.xlu0 %v1328, %s1333
      %v1335 = vpop.permute.xlu0 %1334
      %v1336 = vlaneseq
      %v1337 = vshrl.u32 %v1336, 7
      %v1338 = vsub.s32 1, %v1337
      %v1339 = vrot.slane %v1324, %v1338
      %1341 = vbcast.lane.b32.xlu0 %v1339, 256
      %v1342 = vpop.permute.xlu0 %1341
      %s1344 = sor.u32 256, 8
      %1345 = vbcast.lane.b32.xlu0 %v1339, %s1344
      %v1346 = vpop.permute.xlu0 %1345
      %v1347 = vlaneseq
      %v1348 = vshrl.u32 %v1347, 7
      %v1349 = vsub.s32 2, %v1348
      %v1350 = vrot.slane %v1324, %v1349
      %1352 = vbcast.lane.b32.xlu0 %v1350, 256
      %v1353 = vpop.permute.xlu0 %1352
      %s1355 = sor.u32 256, 8
      %1356 = vbcast.lane.b32.xlu0 %v1350, %s1355
      %v1357 = vpop.permute.xlu0 %1356
      %v1358 = vlaneseq
      %v1359 = vshrl.u32 %v1358, 7
      %v1360 = vsub.s32 3, %v1359
      %v1361 = vrot.slane %v1324, %v1360
      %1363 = vbcast.lane.b32.xlu0 %v1361, 256
      %v1364 = vpop.permute.xlu0 %1363
      %s1366 = sor.u32 256, 8
      %1367 = vbcast.lane.b32.xlu0 %v1361, %s1366
      %v1368 = vpop.permute.xlu0 %1367
      %v1369 = vlaneseq
      %v1370 = vshrl.u32 %v1369, 7
      %v1371 = vsub.s32 4, %v1370
      %v1372 = vrot.slane %v1324, %v1371
      %1374 = vbcast.lane.b32.xlu0 %v1372, 256
      %v1375 = vpop.permute.xlu0 %1374
      %s1377 = sor.u32 256, 8
      %1378 = vbcast.lane.b32.xlu0 %v1372, %s1377
      %v1379 = vpop.permute.xlu0 %1378
      %v1380 = vlaneseq
      %v1381 = vshrl.u32 %v1380, 7
      %v1382 = vsub.s32 5, %v1381
      %v1383 = vrot.slane %v1324, %v1382
      %1385 = vbcast.lane.b32.xlu0 %v1383, 256
      %v1386 = vpop.permute.xlu0 %1385
      %s1388 = sor.u32 256, 8
      %1389 = vbcast.lane.b32.xlu0 %v1383, %s1388
      %v1390 = vpop.permute.xlu0 %1389
      %v1391 = vlaneseq
      %v1392 = vshrl.u32 %v1391, 7
      %v1393 = vsub.s32 6, %v1392
      %v1394 = vrot.slane %v1324, %v1393
      %1396 = vbcast.lane.b32.xlu0 %v1394, 256
      %v1397 = vpop.permute.xlu0 %1396
      %s1399 = sor.u32 256, 8
      %1400 = vbcast.lane.b32.xlu0 %v1394, %s1399
      %v1401 = vpop.permute.xlu0 %1400
      %v1402 = vlaneseq
      %v1403 = vshrl.u32 %v1402, 7
      %v1404 = vsub.s32 7, %v1403
      %v1405 = vrot.slane %v1324, %v1404
      %1407 = vbcast.lane.b32.xlu0 %v1405, 256
      %v1408 = vpop.permute.xlu0 %1407
      %s1410 = sor.u32 256, 8
      %1411 = vbcast.lane.b32.xlu0 %v1405, %s1410
      %v1412 = vpop.permute.xlu0 %1411
      %v1413 = vadd.f32 %v1308, %v1331
      %v1414 = vadd.f32 %v1309, %v1335
      %v1415 = vadd.f32 %v1310, %v1342
      %v1416 = vadd.f32 %v1311, %v1346
      %v1417 = vadd.f32 %v1312, %v1353
      %v1418 = vadd.f32 %v1313, %v1357
      %v1419 = vadd.f32 %v1314, %v1364
      %v1420 = vadd.f32 %v1315, %v1368
      %v1421 = vadd.f32 %v1316, %v1375
      %v1422 = vadd.f32 %v1317, %v1379
      %v1423 = vadd.f32 %v1318, %v1386
      %v1424 = vadd.f32 %v1319, %v1390
      %v1425 = vadd.f32 %v1320, %v1397
      %v1426 = vadd.f32 %v1321, %v1401
      %v1427 = vadd.f32 %v1322, %v1408
      %v1428 = vadd.f32 %v1323, %v1412
      %vm1429 = vcmp.gt.f32.partialorder %v1413, 0.0
      %vm1430 = vcmp.gt.f32.partialorder %v1414, 0.0
      %vm1431 = vcmp.gt.f32.partialorder %v1415, 0.0
      %vm1432 = vcmp.gt.f32.partialorder %v1416, 0.0
      %vm1433 = vcmp.gt.f32.partialorder %v1417, 0.0
      %vm1434 = vcmp.gt.f32.partialorder %v1418, 0.0
      %vm1435 = vcmp.gt.f32.partialorder %v1419, 0.0
      %vm1436 = vcmp.gt.f32.partialorder %v1420, 0.0
      %vm1437 = vcmp.gt.f32.partialorder %v1421, 0.0
      %vm1438 = vcmp.gt.f32.partialorder %v1422, 0.0
      %vm1439 = vcmp.gt.f32.partialorder %v1423, 0.0
      %vm1440 = vcmp.gt.f32.partialorder %v1424, 0.0
      %vm1441 = vcmp.gt.f32.partialorder %v1425, 0.0
      %vm1442 = vcmp.gt.f32.partialorder %v1426, 0.0
      %vm1443 = vcmp.gt.f32.partialorder %v1427, 0.0
      %vm1444 = vcmp.gt.f32.partialorder %v1428, 0.0
      %v1445 = vmin.f32 %v1413, 0.0
      %v1446 = vmin.f32 %v1414, 0.0
      %v1447 = vmin.f32 %v1415, 0.0
      %v1448 = vmin.f32 %v1416, 0.0
      %v1449 = vmin.f32 %v1417, 0.0
      %v1450 = vmin.f32 %v1418, 0.0
      %v1451 = vmin.f32 %v1419, 0.0
      %v1452 = vmin.f32 %v1420, 0.0
      %v1453 = vmin.f32 %v1421, 0.0
      %v1454 = vmin.f32 %v1422, 0.0
      %v1455 = vmin.f32 %v1423, 0.0
      %v1456 = vmin.f32 %v1424, 0.0
      %v1457 = vmin.f32 %v1425, 0.0
      %v1458 = vmin.f32 %v1426, 0.0
      %v1459 = vmin.f32 %v1427, 0.0
      %v1460 = vmin.f32 %v1428, 0.0
      %v1461 = vmul.f32 %v1445, 1.442695
      %v1462 = vpow.pop %v1461
      %v1463 = vmul.f32 %v1446, 1.442695
      %v1464 = vpow.pop %v1463
      %v1465 = vmul.f32 %v1447, 1.442695
      %v1466 = vpow.pop %v1465
      %v1467 = vmul.f32 %v1448, 1.442695
      %v1468 = vpow.pop %v1467
      %v1469 = vmul.f32 %v1449, 1.442695
      %v1470 = vpow.pop %v1469
      %v1471 = vmul.f32 %v1450, 1.442695
      %v1472 = vpow.pop %v1471
      %v1473 = vmul.f32 %v1451, 1.442695
      %v1474 = vpow.pop %v1473
      %v1475 = vmul.f32 %v1452, 1.442695
      %v1476 = vpow.pop %v1475
      %v1477 = vmul.f32 %v1453, 1.442695
      %v1478 = vpow.pop %v1477
      %v1479 = vmul.f32 %v1454, 1.442695
      %v1480 = vpow.pop %v1479
      %v1481 = vmul.f32 %v1455, 1.442695
      %v1482 = vpow.pop %v1481
      %v1483 = vmul.f32 %v1456, 1.442695
      %v1484 = vpow.pop %v1483
      %v1485 = vmul.f32 %v1457, 1.442695
      %v1486 = vpow.pop %v1485
      %v1487 = vmul.f32 %v1458, 1.442695
      %v1488 = vpow.pop %v1487
      %v1489 = vmul.f32 %v1459, 1.442695
      %v1490 = vpow.pop %v1489
      %v1491 = vmul.f32 %v1460, 1.442695
      %v1492 = vpow.pop %v1491
      %v1493 = vsub.f32 %v1462, 1.0
      %v1494 = vsub.f32 %v1464, 1.0
      %v1495 = vsub.f32 %v1466, 1.0
      %v1496 = vsub.f32 %v1468, 1.0
      %v1497 = vsub.f32 %v1470, 1.0
      %v1498 = vsub.f32 %v1472, 1.0
      %v1499 = vsub.f32 %v1474, 1.0
      %v1500 = vsub.f32 %v1476, 1.0
      %v1501 = vsub.f32 %v1478, 1.0
      %v1502 = vsub.f32 %v1480, 1.0
      %v1503 = vsub.f32 %v1482, 1.0
      %v1504 = vsub.f32 %v1484, 1.0
      %v1505 = vsub.f32 %v1486, 1.0
      %v1506 = vsub.f32 %v1488, 1.0
      %v1507 = vsub.f32 %v1490, 1.0
      %v1508 = vsub.f32 %v1492, 1.0
      %v1509 = vsel %vm1429, %v1413, %v1493
      %v1510 = vsel %vm1430, %v1414, %v1494
      %v1511 = vsel %vm1431, %v1415, %v1495
      %v1512 = vsel %vm1432, %v1416, %v1496
      %v1513 = vsel %vm1433, %v1417, %v1497
      %v1514 = vsel %vm1434, %v1418, %v1498
      %v1515 = vsel %vm1435, %v1419, %v1499
      %v1516 = vsel %vm1436, %v1420, %v1500
      %v1517 = vsel %vm1437, %v1421, %v1501
      %v1518 = vsel %vm1438, %v1422, %v1502
      %v1519 = vsel %vm1439, %v1423, %v1503
      %v1520 = vsel %vm1440, %v1424, %v1504
      %v1521 = vsel %vm1441, %v1425, %v1505
      %v1522 = vsel %vm1442, %v1426, %v1506
      %v1523 = vsel %vm1443, %v1427, %v1507
      %v1524 = vsel %vm1444, %v1428, %v1508
      %v1525 = vld [vmem:[%s4] sm:$0xf]
      %v1526 = vpack.c.bf16 %v1510, %v1509
      %v1527 = vpack.c.bf16 %v1512, %v1511
      %v1528 = vpack.c.bf16 %v1514, %v1513
      %v1529 = vpack.c.bf16 %v1516, %v1515
      %v1530 = vpack.c.bf16 %v1518, %v1517
      %v1531 = vpack.c.bf16 %v1520, %v1519
      %v1532 = vpack.c.bf16 %v1522, %v1521
      %v1533 = vpack.c.bf16 %v1524, %v1523
      %v1534 = vld [vmem:[%s6] sm:$0xff]
      %1536 = vset.pattern.permute.xlu0 0
      %1537 = vperm.xlu0 %1536, %v1534
      %v1538 = vpop.permute.xlu0 %1537
      %1540 = vmatprep.subr.bf16.mxu0 0
      %1541 = vmatpush1.bf16.msra.mxu0 %v1526
      %1542 = vmatprep.subr.bf16.mxu0 0
      %1543 = vmatpush1.bf16.msra.mxu0 %v1527
      %1544 = vmatprep.subr.bf16.mxu0 0
      %1545 = vmatpush1.bf16.msra.mxu0 %v1528
      %1546 = vmatprep.subr.bf16.mxu0 0
      %1547 = vmatpush1.bf16.msra.mxu0 %v1529
      %1548 = vmatprep.subr.bf16.mxu0 0
      %1549 = vmatpush1.bf16.msra.mxu0 %v1530
      %1550 = vmatprep.subr.bf16.mxu0 0
      %1551 = vmatpush1.bf16.msra.mxu0 %v1531
      %1552 = vmatprep.subr.bf16.mxu0 0
      %1553 = vmatpush1.bf16.msra.mxu0 %v1532
      %1554 = vmatprep.subr.bf16.mxu0 0
      %1555 = vmatpush1.bf16.msra.mxu0 %v1533
      %1556 = vmatprep.subr.bf16.mxu0 0
      %1557 = vmatpush1.bf16.msra.mxu0 0
      %1558 = vmatprep.subr.bf16.mxu0 0
      %1559 = vmatpush1.bf16.msra.mxu0 0
      %1560 = vmatprep.subr.bf16.mxu0 0
      %1561 = vmatpush1.bf16.msra.mxu0 0
      %1562 = vmatprep.subr.bf16.mxu0 0
      %1563 = vmatpush1.bf16.msra.mxu0 0
      %1564 = vmatprep.subr.bf16.mxu0 0
      %1565 = vmatpush1.bf16.msra.mxu0 0
      %1566 = vmatprep.subr.bf16.mxu0 0
      %1567 = vmatpush1.bf16.msra.mxu0 0
      %1568 = vmatprep.subr.bf16.mxu0 0
      %1569 = vmatpush1.bf16.msra.mxu0 0
      %1570 = vmatprep.subr.bf16.mxu0 0
      %1571 = vmatpush1.bf16.msra.mxu0 0
      %1572 = vmatprep.mubr.bf16.mxu0 0
      %1573 = vmatmul.mubr.bf16.gmra.mrb[0].mxu0 %v1525
      %v1574 = vpop.f32.mrb[0].mxu0
      %v1575 = vadd.f32 %v1538, %v1574
      %v1576 = vpop.f32.mrb[0].mxu0
      %v1577 = vpop.f32.mrb[0].mxu0
      %v1578 = vpop.f32.mrb[0].mxu0
      %1579 = vdwg.mxu0
      %vm1580 = vcmp.gt.f32.partialorder %v1575, 0.0
      %v1581 = vmin.f32 %v1575, 0.0
      %v1582 = vmul.f32 %v1581, 1.442695
      %v1583 = vpow.pop %v1582
      %v1584 = vsub.f32 %v1583, 1.0
      %v1585 = vsel %vm1580, %v1575, %v1584
      %1586 = vst.msk [vmem:[#allocation11] sm:$0xff] %vm383, %v1585
    $region49: #{tpu_custom_call.1} parent=1 // pred_fallthru
      _
    // Predicated region
    $region50: #{tpu_custom_call.1} parent=1 // pred_check
      _
    $region51: #{tpu_custom_call.1} parent=1 // pred_check_branch
      %1588 = sbr.rel (0) target = $region53
    $region52: #{tpu_custom_call.1} parent=1 // pred_region
      %s1590 = ssub.s32 128, 128
      %1591 = vsyncadd [#allocation7], %s1590
      %s1593 = sshll.u32 [#allocation11], 4
      %s1594 = int_to_ptr.vmem [resolvable:$true] %s1593
      %1596 = dma.vmem_to_hbm [thread:$0]  %s1594, 128, %s7, [#allocation7]
    $region53: #{tpu_custom_call.1} parent=1 // pred_fallthru
      _
    // Predicated region
    $region54: #{tpu_custom_call.1} parent=1 // pred_check
      _
    $region55: #{tpu_custom_call.1} parent=1 // pred_check_branch
      %1598 = sbr.rel (0) target = $region57
    $region56: #{tpu_custom_call.1} parent=1 // pred_region
      %1599 = dma.done [#allocation7], 128
    $region57: #{tpu_custom_call.1} parent=1 // pred_fallthru
      _
    %1600 = vsyncpa [#allocation6], 1
    %1601 = vsyncpa [#allocation9], 1
    %1602 = vsyncpa [#allocation7], 1

</llo_original>
